<compile_context>
chip_gen: v6e
topology: v6e:2x2x1
jax: 0.10.0
libtpu: 0.0.40
codegen_flags: <defaults>
</compile_context>

<pallas_src>
import math
import functools

import jax
import jax.numpy as jnp
from jax.experimental import pallas as pl
from jax.experimental.pallas import tpu as pltpu


def bert_encoder_kernel(num_heads,
                        vl_ref,                 # scalar-prefetch: (B,) int32 in SMEM
                        x_ref,                  # (S, D) f32  embedded input (batch b)
                        wqkv_ref, bqkv_ref,     # (D, 3D) bf16, (1, 3D) f32
                        woh_ref, bo_ref,        # (H, dh, D) bf16, (1, D) f32
                        g1_ref, be1_ref,        # (1, D) f32
                        w1_ref, b1_ref,         # (D, F) bf16, (1, F) f32
                        w2_ref, b2_ref,         # (F, D) bf16, (1, D) f32
                        g2_ref, be2_ref,        # (1, D) f32
                        o_ref):                 # (S, D) f32  resident activation / output
    b = pl.program_id(0)
    layer = pl.program_id(1)
    S, D = x_ref.shape
    H = num_heads
    dh = D // H
    scale = 1.0 / math.sqrt(dh)

    # Layer 0 seeds the resident activation from the embedded input.
    @pl.when(layer == 0)
    def _():
        o_ref[...] = x_ref[...]

    x = o_ref[...]                                # (S, D) f32, current activation
    xb = x.astype(jnp.bfloat16)

    # ---- fused QKV projection: one wide MXU matmul, f32 accumulation ----
    qkv = jnp.dot(xb, wqkv_ref[...], preferred_element_type=jnp.float32)
    qkv = qkv + bqkv_ref[...]                     # (S, 3D) f32

    def split_heads(z):                           # (S, D) f32 -> (H, S, dh) bf16
        zh = jnp.stack([z[:, h * dh:(h + 1) * dh] for h in range(H)], axis=0)
        return zh.astype(jnp.bfloat16)

    qh = split_heads(qkv[:, 0 * D:1 * D])
    kh = split_heads(qkv[:, 1 * D:2 * D])
    vh = split_heads(qkv[:, 2 * D:3 * D])

    # ---- batched-head scores + masked softmax (key-only mask, as reference) ----
    sc = jnp.einsum('hqd,hkd->hqk', qh, kh,
                    preferred_element_type=jnp.float32) * scale     # (H, S, S) f32
    key_ids = jax.lax.broadcasted_iota(jnp.int32, (1, 1, S), 2)     # (1,1,S) row mask
    sc = jnp.where(key_ids < vl_ref[b], sc, jnp.float32(-1e6))
    sc = sc - jnp.max(sc, axis=-1, keepdims=True)
    e = jnp.exp(sc)
    p = e * pl.reciprocal(jnp.sum(e, axis=-1, keepdims=True), approx=True)

    ctx = jnp.einsum('hqk,hkd->hqd', p.astype(jnp.bfloat16), vh,
                     preferred_element_type=jnp.float32)            # (H, S, dh)

    # Output projection: per-head matmul against Wo[h] summed over heads
    # (mathematically identical to concat(heads) @ Wo), plus bias.
    heads_proj = jnp.einsum('hqd,hdo->hqo', ctx.astype(jnp.bfloat16), woh_ref[...],
                            preferred_element_type=jnp.float32)     # (H, S, D)
    attn = jnp.sum(heads_proj, axis=0) + bo_ref[...]                # (S, D)

    def layernorm(z, g, beta):
        mu = jnp.mean(z, axis=-1, keepdims=True)
        var = jnp.mean((z - mu) ** 2, axis=-1, keepdims=True)
        return (z - mu) * jax.lax.rsqrt(var + 1e-5) * g + beta

    # AddNorm1
    y = layernorm(attn + x, g1_ref[...], be1_ref[...])

    # Position-wise FFN (bf16 matmul inputs, f32 accumulation, ReLU in f32).
    # TODO(synk): for very large ffn_num_hiddens, tile the FFN over F with an
    # extra "arbitrary" grid axis + VMEM accumulator to bound VMEM (v7x 64 MiB).
    h1 = jnp.dot(y.astype(jnp.bfloat16), w1_ref[...],
                 preferred_element_type=jnp.float32) + b1_ref[...]
    h1 = jnp.maximum(h1, 0.0)
    ffn = jnp.dot(h1.astype(jnp.bfloat16), w2_ref[...],
                  preferred_element_type=jnp.float32) + b2_ref[...]

    # AddNorm2 -> becomes the resident activation for the next layer
    o_ref[...] = layernorm(ffn + y, g2_ref[...], be2_ref[...])


def bert_encoder_apply(x_emb, valid_lens, params):
    """Run all encoder blocks in one fused pallas_call over grid (batch, layer)."""
    B, S, D = x_emb.shape
    H = params['num_heads']
    L = params['wqkv'].shape[0]
    F = params['w1'].shape[-1]
    dh = D // H

    def stacked_spec(*tail):
        n = len(tail)
        return pl.BlockSpec((None,) + tail,
                            lambda b, l, vl, _n=n: (l,) + (0,) * _n)

    in_specs = [
        pl.BlockSpec((None, S, D), lambda b, l, vl: (b, 0, 0)),   # x (embedded)
        stacked_spec(D, 3 * D),     # wqkv   (bf16)
        stacked_spec(1, 3 * D),     # bqkv
        stacked_spec(H, dh, D),     # wo per-head (bf16)
        stacked_spec(1, D),         # bo
        stacked_spec(1, D),         # ln1 gamma
        stacked_spec(1, D),         # ln1 beta
        stacked_spec(D, F),         # w1    (bf16)
        stacked_spec(1, F),         # b1
        stacked_spec(F, D),         # w2    (bf16)
        stacked_spec(1, D),         # b2
        stacked_spec(1, D),         # ln2 gamma
        stacked_spec(1, D),         # ln2 beta
    ]

    grid_spec = pltpu.PrefetchScalarGridSpec(
        num_scalar_prefetch=1,
        grid=(B, L),
        in_specs=in_specs,
        out_specs=pl.BlockSpec((None, S, D), lambda b, l, vl: (b, 0, 0)),
    )

    # VMEM budget: double-buffered bf16 weight blocks + generous activation headroom.
    weight_block_bytes = 2 * 2 * (D * 3 * D + D * D + D * F + F * D)
    act_bytes = 4 * S * D
    vmem_limit = int(min(100 * 1024 * 1024,
                         max(16 * 1024 * 1024, 2 * weight_block_bytes + 32 * act_bytes)))

    kernel = functools.partial(bert_encoder_kernel, H)
    return pl.pallas_call(
        kernel,
        out_shape=jax.ShapeDtypeStruct((B, S, D), jnp.float32),
        grid_spec=grid_spec,
        compiler_params=pltpu.CompilerParams(
            dimension_semantics=("parallel", "arbitrary"),
            vmem_limit_bytes=vmem_limit,
        ),
    )(valid_lens, x_emb,
      params['wqkv'], params['bqkv'], params['wo_h'], params['bo'],
      params['g1'], params['be1'],
      params['w1'], params['b1'], params['w2'], params['b2'],
      params['g2'], params['be2'])


def bert_encoder_forward(tokens, segments, valid_lens, params):
    # This snapshot's forward does NOT add the segment embedding.
    del segments
    # Token embedding gather + positional add in plain XLA (outside the kernel).
    X = params['tok_emb'][tokens]                                  # (B, S, D)
    X = X + params['pos_emb'][:, :tokens.shape[1], :]
    return bert_encoder_apply(X.astype(jnp.float32), valid_lens, params)


def init_params(key, vocab_size, D, F, num_heads, num_layers, max_len):
    k_tok, k_seg, k_pos, k_blk = jax.random.split(key, 4)
    dh = D // num_heads

    def one_layer(kl):
        ks = jax.random.split(kl, 10)
        wq = 0.02 * jax.random.normal(ks[0], (D, D), jnp.float32)
        bq = 0.02 * jax.random.normal(ks[1], (1, D), jnp.float32)
        wk = 0.02 * jax.random.normal(ks[2], (D, D), jnp.float32)
        bk = 0.02 * jax.random.normal(ks[3], (1, D), jnp.float32)
        wv = 0.02 * jax.random.normal(ks[4], (D, D), jnp.float32)
        bv = 0.02 * jax.random.normal(ks[5], (1, D), jnp.float32)
        wo = 0.02 * jax.random.normal(ks[6], (D, D), jnp.float32)
        bo = 0.02 * jax.random.normal(ks[7], (1, D), jnp.float32)
        w1 = 0.02 * jax.random.normal(ks[8], (D, F), jnp.float32)
        w2 = 0.02 * jax.random.normal(ks[9], (F, D), jnp.float32)
        return {
            'wqkv': jnp.concatenate([wq, wk, wv], axis=1),        # (D, 3D) fused QKV
            'bqkv': jnp.concatenate([bq, bk, bv], axis=1),        # (1, 3D)
            'wo_h': wo.reshape(num_heads, dh, D),                 # (H, dh, D) per-head Wo
            'bo': bo,
            'g1': jnp.ones((1, D), jnp.float32),
            'be1': jnp.zeros((1, D), jnp.float32),
            'w1': w1, 'b1': jnp.zeros((1, F), jnp.float32),
            'w2': w2, 'b2': jnp.zeros((1, D), jnp.float32),
            'g2': jnp.ones((1, D), jnp.float32),
            'be2': jnp.zeros((1, D), jnp.float32),
        }

    layers = [one_layer(kl) for kl in jax.random.split(k_blk, num_layers)]
    stacked = {name: jnp.stack([lyr[name] for lyr in layers], axis=0)
               for name in layers[0]}
    # Store the large matmul weights in bf16 (halves HBM/VMEM traffic, bf16 MXU path).
    for name in ('wqkv', 'wo_h', 'w1', 'w2'):
        stacked[name] = stacked[name].astype(jnp.bfloat16)

    params = {
        'tok_emb': 0.02 * jax.random.normal(k_tok, (vocab_size, D), jnp.float32),
        'seg_emb': 0.02 * jax.random.normal(k_seg, (2, D), jnp.float32),  # unused by this snapshot
        'pos_emb': 0.02 * jax.random.normal(k_pos, (1, max_len, D), jnp.float32),
        'num_heads': num_heads,
    }
    params.update(stacked)
    return params


if __name__ == "__main__":
    # Small, forward-consistent shapes.
    B, S = 2, 8
    vocab_size = 50
    num_hiddens = 32
    ffn_num_hiddens = 64
    num_heads = 4
    num_layers = 2
    max_len = 64

    key = jax.random.PRNGKey(0)
    k_tok, k_seg, k_par = jax.random.split(key, 3)

    tokens = jax.random.randint(k_tok, (B, S), 0, vocab_size, dtype=jnp.int32)
    segments = jax.random.randint(k_seg, (B, S), 0, 2, dtype=jnp.int32)
    valid_lens = jnp.array([8, 5], dtype=jnp.int32)

    params = init_params(k_par, vocab_size, num_hiddens, ffn_num_hiddens,
                         num_heads, num_layers, max_len)

    out = bert_encoder_forward(tokens, segments, valid_lens, params)
    out = jax.block_until_ready(out)
    assert out.shape == (B, S, num_hiddens)
    assert bool(jnp.all(jnp.isfinite(out)))
    print("KERNEL_OK")
</pallas_src>

<mosaic_0001>
module attributes {stable_mosaic.version = 11 : i64} {
  func.func @bert_encoder_kernel(%arg0: i32, %arg1: i32, %arg2: memref<2xi32, #tpu.memory_space<smem>>, %arg3: memref<1x8x32xf32, #tpu.memory_space<vmem>>, %arg4: memref<1x32x96xbf16, #tpu.memory_space<vmem>>, %arg5: memref<1x1x96xf32, #tpu.memory_space<vmem>>, %arg6: memref<1x4x8x32xbf16, #tpu.memory_space<vmem>>, %arg7: memref<1x1x32xf32, #tpu.memory_space<vmem>>, %arg8: memref<1x1x32xf32, #tpu.memory_space<vmem>>, %arg9: memref<1x1x32xf32, #tpu.memory_space<vmem>>, %arg10: memref<1x32x64xbf16, #tpu.memory_space<vmem>>, %arg11: memref<1x1x64xf32, #tpu.memory_space<vmem>>, %arg12: memref<1x64x32xbf16, #tpu.memory_space<vmem>>, %arg13: memref<1x1x32xf32, #tpu.memory_space<vmem>>, %arg14: memref<1x1x32xf32, #tpu.memory_space<vmem>>, %arg15: memref<1x1x32xf32, #tpu.memory_space<vmem>>, %arg16: memref<1x8x32xf32, #tpu.memory_space<vmem>>) attributes {dimension_semantics = [#tpu.dimension_semantics<parallel>, #tpu.dimension_semantics<arbitrary>], iteration_bounds = array<i64: 2, 2>, scalar_prefetch = 1 : i64, scratch_operands = 0 : i64, tpu.core_type = #tpu.core_type<tc>, window_params = [{transform_indices = @transform_0, window_bounds = array<i64: 1, 8, 32>}, {transform_indices = @transform_1, window_bounds = array<i64: 1, 32, 96>}, {transform_indices = @transform_2, window_bounds = array<i64: 1, 1, 96>}, {transform_indices = @transform_3, window_bounds = array<i64: 1, 4, 8, 32>}, {transform_indices = @transform_4, window_bounds = array<i64: 1, 1, 32>}, {transform_indices = @transform_5, window_bounds = array<i64: 1, 1, 32>}, {transform_indices = @transform_6, window_bounds = array<i64: 1, 1, 32>}, {transform_indices = @transform_7, window_bounds = array<i64: 1, 32, 64>}, {transform_indices = @transform_8, window_bounds = array<i64: 1, 1, 64>}, {transform_indices = @transform_9, window_bounds = array<i64: 1, 64, 32>}, {transform_indices = @transform_10, window_bounds = array<i64: 1, 1, 32>}, {transform_indices = @transform_11, window_bounds = array<i64: 1, 1, 32>}, {transform_indices = @transform_12, window_bounds = array<i64: 1, 1, 32>}, {transform_indices = @transform_13, window_bounds = array<i64: 1, 8, 32>}]} {
    %c0_i32 = arith.constant 0 : i32
    %0 = arith.cmpi eq, %arg1, %c0_i32 : i32
    %1 = arith.extui %0 : i1 to i32
    %c0_i32_0 = arith.constant 0 : i32
    %2 = arith.cmpi ne, %1, %c0_i32_0 : i32
    scf.if %2 {
      %c0_64 = arith.constant 0 : index
      %c0_65 = arith.constant 0 : index
      %c0_66 = arith.constant 0 : index
      %154 = vector.load %arg3[%c0_64, %c0_65, %c0_66] : memref<1x8x32xf32, #tpu.memory_space<vmem>>, vector<1x8x32xf32>
      %155 = vector.shape_cast %154 : vector<1x8x32xf32> to vector<8x32xf32>
      %c0_67 = arith.constant 0 : index
      %c0_68 = arith.constant 0 : index
      %c0_69 = arith.constant 0 : index
      %156 = vector.load %arg16[%c0_67, %c0_68, %c0_69] : memref<1x8x32xf32, #tpu.memory_space<vmem>>, vector<1x8x32xf32>
      %157 = vector.shape_cast %156 : vector<1x8x32xf32> to vector<8x32xf32>
      %158 = vector.shape_cast %155 : vector<8x32xf32> to vector<1x8x32xf32>
      tpu.vector_store %arg16[%c0_67, %c0_68, %c0_69], %158 {strides = array<i32>} : memref<1x8x32xf32, #tpu.memory_space<vmem>>, vector<1x8x32xf32>,
    } else {
    }
    %c0 = arith.constant 0 : index
    %c0_1 = arith.constant 0 : index
    %c0_2 = arith.constant 0 : index
    %3 = vector.load %arg16[%c0, %c0_1, %c0_2] : memref<1x8x32xf32, #tpu.memory_space<vmem>>, vector<1x8x32xf32>
    %4 = vector.shape_cast %3 : vector<1x8x32xf32> to vector<8x32xf32>
    %5 = arith.truncf %4 : vector<8x32xf32> to vector<8x32xbf16>
    %c0_3 = arith.constant 0 : index
    %c0_4 = arith.constant 0 : index
    %c0_5 = arith.constant 0 : index
    %6 = vector.load %arg4[%c0_3, %c0_4, %c0_5] : memref<1x32x96xbf16, #tpu.memory_space<vmem>>, vector<1x32x96xbf16>
    %7 = vector.shape_cast %6 : vector<1x32x96xbf16> to vector<32x96xbf16>
    %cst = arith.constant dense<0.000000e+00> : vector<8x96xf32>
    %8 = tpu.matmul %5, %7, %cst {dimension_numbers = #tpu.dot_dimension_numbers<[1], [0], [0], [1], [0, 0, 1, 1], [], []>} : vector<8x32xbf16>, vector<32x96xbf16>, vector<8x96xf32> -> vector<8x96xf32>
    %c0_6 = arith.constant 0 : index
    %c0_7 = arith.constant 0 : index
    %c0_8 = arith.constant 0 : index
    %9 = vector.load %arg5[%c0_6, %c0_7, %c0_8] : memref<1x1x96xf32, #tpu.memory_space<vmem>>, vector<1x1x96xf32>
    %10 = vector.shape_cast %9 : vector<1x1x96xf32> to vector<1x96xf32>
    %11 = vector.broadcast %10 : vector<1x96xf32> to vector<8x96xf32>
    %12 = arith.addf %8, %11 : vector<8x96xf32>
    %13 = vector.extract_strided_slice %12 {offsets = [0, 0], sizes = [8, 32], strides = [1, 1]} : vector<8x96xf32> to vector<8x32xf32>
    %14 = vector.extract_strided_slice %13 {offsets = [0, 0], sizes = [8, 8], strides = [1, 1]} : vector<8x32xf32> to vector<8x8xf32>
    %15 = vector.extract_strided_slice %13 {offsets = [0, 8], sizes = [8, 8], strides = [1, 1]} : vector<8x32xf32> to vector<8x8xf32>
    %16 = vector.extract_strided_slice %13 {offsets = [0, 16], sizes = [8, 8], strides = [1, 1]} : vector<8x32xf32> to vector<8x8xf32>
    %17 = vector.extract_strided_slice %13 {offsets = [0, 24], sizes = [8, 8], strides = [1, 1]} : vector<8x32xf32> to vector<8x8xf32>
    %18 = vector.shape_cast %14 : vector<8x8xf32> to vector<1x8x8xf32>
    %19 = vector.shape_cast %15 : vector<8x8xf32> to vector<1x8x8xf32>
    %20 = vector.shape_cast %16 : vector<8x8xf32> to vector<1x8x8xf32>
    %21 = vector.shape_cast %17 : vector<8x8xf32> to vector<1x8x8xf32>
    %22 = tpu.concatenate %18, %19, %20, %21 in 0 : vector<1x8x8xf32>, vector<1x8x8xf32>, vector<1x8x8xf32>, vector<1x8x8xf32> -> vector<4x8x8xf32>
    %23 = arith.truncf %22 : vector<4x8x8xf32> to vector<4x8x8xbf16>
    %24 = vector.extract_strided_slice %12 {offsets = [0, 32], sizes = [8, 32], strides = [1, 1]} : vector<8x96xf32> to vector<8x32xf32>
    %25 = vector.extract_strided_slice %24 {offsets = [0, 0], sizes = [8, 8], strides = [1, 1]} : vector<8x32xf32> to vector<8x8xf32>
    %26 = vector.extract_strided_slice %24 {offsets = [0, 8], sizes = [8, 8], strides = [1, 1]} : vector<8x32xf32> to vector<8x8xf32>
    %27 = vector.extract_strided_slice %24 {offsets = [0, 16], sizes = [8, 8], strides = [1, 1]} : vector<8x32xf32> to vector<8x8xf32>
    %28 = vector.extract_strided_slice %24 {offsets = [0, 24], sizes = [8, 8], strides = [1, 1]} : vector<8x32xf32> to vector<8x8xf32>
    %29 = vector.shape_cast %25 : vector<8x8xf32> to vector<1x8x8xf32>
    %30 = vector.shape_cast %26 : vector<8x8xf32> to vector<1x8x8xf32>
    %31 = vector.shape_cast %27 : vector<8x8xf32> to vector<1x8x8xf32>
    %32 = vector.shape_cast %28 : vector<8x8xf32> to vector<1x8x8xf32>
    %33 = tpu.concatenate %29, %30, %31, %32 in 0 : vector<1x8x8xf32>, vector<1x8x8xf32>, vector<1x8x8xf32>, vector<1x8x8xf32> -> vector<4x8x8xf32>
    %34 = arith.truncf %33 : vector<4x8x8xf32> to vector<4x8x8xbf16>
    %35 = vector.extract_strided_slice %12 {offsets = [0, 64], sizes = [8, 32], strides = [1, 1]} : vector<8x96xf32> to vector<8x32xf32>
    %36 = vector.extract_strided_slice %35 {offsets = [0, 0], sizes = [8, 8], strides = [1, 1]} : vector<8x32xf32> to vector<8x8xf32>
    %37 = vector.extract_strided_slice %35 {offsets = [0, 8], sizes = [8, 8], strides = [1, 1]} : vector<8x32xf32> to vector<8x8xf32>
    %38 = vector.extract_strided_slice %35 {offsets = [0, 16], sizes = [8, 8], strides = [1, 1]} : vector<8x32xf32> to vector<8x8xf32>
    %39 = vector.extract_strided_slice %35 {offsets = [0, 24], sizes = [8, 8], strides = [1, 1]} : vector<8x32xf32> to vector<8x8xf32>
    %40 = vector.shape_cast %36 : vector<8x8xf32> to vector<1x8x8xf32>
    %41 = vector.shape_cast %37 : vector<8x8xf32> to vector<1x8x8xf32>
    %42 = vector.shape_cast %38 : vector<8x8xf32> to vector<1x8x8xf32>
    %43 = vector.shape_cast %39 : vector<8x8xf32> to vector<1x8x8xf32>
    %44 = tpu.concatenate %40, %41, %42, %43 in 0 : vector<1x8x8xf32>, vector<1x8x8xf32>, vector<1x8x8xf32>, vector<1x8x8xf32> -> vector<4x8x8xf32>
    %45 = arith.truncf %44 : vector<4x8x8xf32> to vector<4x8x8xbf16>
    "tpu.trace_start"() <{level = 10 : i32, message = "hqd,hkd->hqk"}> : () -> ()
    %cst_9 = arith.constant dense<0.000000e+00> : vector<4x8x8xf32>
    %46 = tpu.matmul %23, %34, %cst_9 {dimension_numbers = #tpu.dot_dimension_numbers<[2], [2], [1], [1], [0, 0, 0, 1, 1, 1], [0], [0]>} : vector<4x8x8xbf16>, vector<4x8x8xbf16>, vector<4x8x8xf32> -> vector<4x8x8xf32>
    "tpu.trace_stop"() : () -> ()
    %cst_10 = arith.constant 0.353553385 : f32
    %47 = vector.broadcast %cst_10 : f32 to vector<4x8x8xf32>
    %48 = arith.mulf %46, %47 : vector<4x8x8xf32>
    %49 = tpu.iota {dimensions = array<i32: 2>} : vector<1x1x8xi32>
    %50 = arith.index_cast %arg0 : i32 to index
    %51 = memref.load %arg2[%50] : memref<2xi32, #tpu.memory_space<smem>>
    %52 = vector.broadcast %51 : i32 to vector<1x1x8xi32>
    %53 = arith.cmpi slt, %49, %52 : vector<1x1x8xi32>
    %cst_11 = arith.constant -1.000000e+06 : f32
    %54 = vector.shape_cast %53 : vector<1x1x8xi1> to vector<1x1x8xi1>
    %55 = vector.broadcast %54 : vector<1x1x8xi1> to vector<4x8x8xi1>
    %56 = vector.broadcast %cst_11 : f32 to vector<4x8x8xf32>
    %57 = arith.select %55, %48, %56 : vector<4x8x8xi1>, vector<4x8x8xf32>
    %cst_12 = arith.constant dense<0xFF800000> : vector<4x8xf32>
    %58 = vector.multi_reduction <maximumf>, %57, %cst_12 [2] : vector<4x8x8xf32> to vector<4x8xf32>
    %59 = vector.shape_cast %58 : vector<4x8xf32> to vector<4x8x1xf32>
    %60 = vector.broadcast %59 : vector<4x8x1xf32> to vector<4x8x8xf32>
    %61 = arith.subf %57, %60 : vector<4x8x8xf32>
    %62 = math.exp %61 : vector<4x8x8xf32>
    %cst_13 = arith.constant dense<0.000000e+00> : vector<4x8xf32>
    %63 = vector.multi_reduction <add>, %62, %cst_13 [2] : vector<4x8x8xf32> to vector<4x8xf32>
    %64 = vector.shape_cast %63 : vector<4x8xf32> to vector<4x8x1xf32>
    %65 = tpu.reciprocal %64 {approx = true} : vector<4x8x1xf32> -> vector<4x8x1xf32>
    %66 = vector.broadcast %65 : vector<4x8x1xf32> to vector<4x8x8xf32>
    %67 = arith.mulf %62, %66 : vector<4x8x8xf32>
    %68 = arith.truncf %67 : vector<4x8x8xf32> to vector<4x8x8xbf16>
    "tpu.trace_start"() <{level = 10 : i32, message = "hqk,hkd->hqd"}> : () -> ()
    %cst_14 = arith.constant dense<0.000000e+00> : vector<4x8x8xf32>
    %69 = tpu.matmul %68, %45, %cst_14 {dimension_numbers = #tpu.dot_dimension_numbers<[2], [1], [1], [2], [0, 0, 0, 1, 1, 2], [0], [0]>} : vector<4x8x8xbf16>, vector<4x8x8xbf16>, vector<4x8x8xf32> -> vector<4x8x8xf32>
    "tpu.trace_stop"() : () -> ()
    %70 = arith.truncf %69 : vector<4x8x8xf32> to vector<4x8x8xbf16>
    %c0_15 = arith.constant 0 : index
    %c0_16 = arith.constant 0 : index
    %c0_17 = arith.constant 0 : index
    %c0_18 = arith.constant 0 : index
    %71 = vector.load %arg6[%c0_15, %c0_16, %c0_17, %c0_18] : memref<1x4x8x32xbf16, #tpu.memory_space<vmem>>, vector<1x4x8x32xbf16>
    %72 = vector.shape_cast %71 : vector<1x4x8x32xbf16> to vector<4x8x32xbf16>
    "tpu.trace_start"() <{level = 10 : i32, message = "hqd,hdo->hqo"}> : () -> ()
    %cst_19 = arith.constant dense<0.000000e+00> : vector<4x8x32xf32>
    %73 = tpu.matmul %70, %72, %cst_19 {dimension_numbers = #tpu.dot_dimension_numbers<[2], [1], [1], [2], [0, 0, 0, 1, 1, 2], [0], [0]>} : vector<4x8x8xbf16>, vector<4x8x32xbf16>, vector<4x8x32xf32> -> vector<4x8x32xf32>
    "tpu.trace_stop"() : () -> ()
    %cst_20 = arith.constant dense<0.000000e+00> : vector<8x32xf32>
    %74 = vector.multi_reduction <add>, %73, %cst_20 [0] : vector<4x8x32xf32> to vector<8x32xf32>
    %c0_21 = arith.constant 0 : index
    %c0_22 = arith.constant 0 : index
    %c0_23 = arith.constant 0 : index
    %75 = vector.load %arg7[%c0_21, %c0_22, %c0_23] : memref<1x1x32xf32, #tpu.memory_space<vmem>>, vector<1x1x32xf32>
    %76 = vector.shape_cast %75 : vector<1x1x32xf32> to vector<1x32xf32>
    %77 = vector.broadcast %76 : vector<1x32xf32> to vector<8x32xf32>
    %78 = arith.addf %74, %77 : vector<8x32xf32>
    %79 = arith.addf %78, %4 : vector<8x32xf32>
    %c0_24 = arith.constant 0 : index
    %c0_25 = arith.constant 0 : index
    %c0_26 = arith.constant 0 : index
    %80 = vector.load %arg8[%c0_24, %c0_25, %c0_26] : memref<1x1x32xf32, #tpu.memory_space<vmem>>, vector<1x1x32xf32>
    %81 = vector.shape_cast %80 : vector<1x1x32xf32> to vector<1x32xf32>
    %c0_27 = arith.constant 0 : index
    %c0_28 = arith.constant 0 : index
    %c0_29 = arith.constant 0 : index
    %82 = vector.load %arg9[%c0_27, %c0_28, %c0_29] : memref<1x1x32xf32, #tpu.memory_space<vmem>>, vector<1x1x32xf32>
    %83 = vector.shape_cast %82 : vector<1x1x32xf32> to vector<1x32xf32>
    %cst_30 = arith.constant dense<0.000000e+00> : vector<8xf32>
    %84 = vector.multi_reduction <add>, %79, %cst_30 [1] : vector<8x32xf32> to vector<8xf32>
    %85 = vector.shape_cast %84 : vector<8xf32> to vector<8x1xf32>
    %cst_31 = arith.constant 3.200000e+01 : f32
    %86 = vector.broadcast %cst_31 : f32 to vector<8x1xf32>
    %87 = arith.divf %85, %86 : vector<8x1xf32>
    %88 = vector.broadcast %87 : vector<8x1xf32> to vector<8x32xf32>
    %89 = arith.subf %79, %88 : vector<8x32xf32>
    %90 = arith.mulf %89, %89 : vector<8x32xf32>
    %cst_32 = arith.constant dense<0.000000e+00> : vector<8xf32>
    %91 = vector.multi_reduction <add>, %90, %cst_32 [1] : vector<8x32xf32> to vector<8xf32>
    %92 = vector.shape_cast %91 : vector<8xf32> to vector<8x1xf32>
    %cst_33 = arith.constant 3.200000e+01 : f32
    %93 = vector.broadcast %cst_33 : f32 to vector<8x1xf32>
    %94 = arith.divf %92, %93 : vector<8x1xf32>
    %95 = vector.broadcast %87 : vector<8x1xf32> to vector<8x32xf32>
    %96 = arith.subf %79, %95 : vector<8x32xf32>
    %cst_34 = arith.constant 9.99999974E-6 : f32
    %97 = vector.broadcast %cst_34 : f32 to vector<8x1xf32>
    %98 = arith.addf %94, %97 : vector<8x1xf32>
    %99 = math.rsqrt %98 : vector<8x1xf32>
    %100 = vector.broadcast %99 : vector<8x1xf32> to vector<8x32xf32>
    %101 = arith.mulf %96, %100 : vector<8x32xf32>
    %102 = vector.broadcast %81 : vector<1x32xf32> to vector<8x32xf32>
    %103 = arith.mulf %101, %102 : vector<8x32xf32>
    %104 = vector.broadcast %83 : vector<1x32xf32> to vector<8x32xf32>
    %105 = arith.addf %103, %104 : vector<8x32xf32>
    %106 = arith.truncf %105 : vector<8x32xf32> to vector<8x32xbf16>
    %c0_35 = arith.constant 0 : index
    %c0_36 = arith.constant 0 : index
    %c0_37 = arith.constant 0 : index
    %107 = vector.load %arg10[%c0_35, %c0_36, %c0_37] : memref<1x32x64xbf16, #tpu.memory_space<vmem>>, vector<1x32x64xbf16>
    %108 = vector.shape_cast %107 : vector<1x32x64xbf16> to vector<32x64xbf16>
    %cst_38 = arith.constant dense<0.000000e+00> : vector<8x64xf32>
    %109 = tpu.matmul %106, %108, %cst_38 {dimension_numbers = #tpu.dot_dimension_numbers<[1], [0], [0], [1], [0, 0, 1, 1], [], []>} : vector<8x32xbf16>, vector<32x64xbf16>, vector<8x64xf32> -> vector<8x64xf32>
    %c0_39 = arith.constant 0 : index
    %c0_40 = arith.constant 0 : index
    %c0_41 = arith.constant 0 : index
    %110 = vector.load %arg11[%c0_39, %c0_40, %c0_41] : memref<1x1x64xf32, #tpu.memory_space<vmem>>, vector<1x1x64xf32>
    %111 = vector.shape_cast %110 : vector<1x1x64xf32> to vector<1x64xf32>
    %112 = vector.broadcast %111 : vector<1x64xf32> to vector<8x64xf32>
    %113 = arith.addf %109, %112 : vector<8x64xf32>
    %cst_42 = arith.constant 0.000000e+00 : f32
    %114 = vector.broadcast %cst_42 : f32 to vector<8x64xf32>
    %115 = arith.maximumf %113, %114 : vector<8x64xf32>
    %116 = arith.truncf %115 : vector<8x64xf32> to vector<8x64xbf16>
    %c0_43 = arith.constant 0 : index
    %c0_44 = arith.constant 0 : index
    %c0_45 = arith.constant 0 : index
    %117 = vector.load %arg12[%c0_43, %c0_44, %c0_45] : memref<1x64x32xbf16, #tpu.memory_space<vmem>>, vector<1x64x32xbf16>
    %118 = vector.shape_cast %117 : vector<1x64x32xbf16> to vector<64x32xbf16>
    %cst_46 = arith.constant dense<0.000000e+00> : vector<8x32xf32>
    %119 = tpu.matmul %116, %118, %cst_46 {dimension_numbers = #tpu.dot_dimension_numbers<[1], [0], [0], [1], [0, 0, 1, 1], [], []>} : vector<8x64xbf16>, vector<64x32xbf16>, vector<8x32xf32> -> vector<8x32xf32>
    %c0_47 = arith.constant 0 : index
    %c0_48 = arith.constant 0 : index
    %c0_49 = arith.constant 0 : index
    %120 = vector.load %arg13[%c0_47, %c0_48, %c0_49] : memref<1x1x32xf32, #tpu.memory_space<vmem>>, vector<1x1x32xf32>
    %121 = vector.shape_cast %120 : vector<1x1x32xf32> to vector<1x32xf32>
    %122 = vector.broadcast %121 : vector<1x32xf32> to vector<8x32xf32>
    %123 = arith.addf %119, %122 : vector<8x32xf32>
    %124 = arith.addf %123, %105 : vector<8x32xf32>
    %c0_50 = arith.constant 0 : index
    %c0_51 = arith.constant 0 : index
    %c0_52 = arith.constant 0 : index
    %125 = vector.load %arg14[%c0_50, %c0_51, %c0_52] : memref<1x1x32xf32, #tpu.memory_space<vmem>>, vector<1x1x32xf32>
    %126 = vector.shape_cast %125 : vector<1x1x32xf32> to vector<1x32xf32>
    %c0_53 = arith.constant 0 : index
    %c0_54 = arith.constant 0 : index
    %c0_55 = arith.constant 0 : index
    %127 = vector.load %arg15[%c0_53, %c0_54, %c0_55] : memref<1x1x32xf32, #tpu.memory_space<vmem>>, vector<1x1x32xf32>
    %128 = vector.shape_cast %127 : vector<1x1x32xf32> to vector<1x32xf32>
    %cst_56 = arith.constant dense<0.000000e+00> : vector<8xf32>
    %129 = vector.multi_reduction <add>, %124, %cst_56 [1] : vector<8x32xf32> to vector<8xf32>
    %130 = vector.shape_cast %129 : vector<8xf32> to vector<8x1xf32>
    %cst_57 = arith.constant 3.200000e+01 : f32
    %131 = vector.broadcast %cst_57 : f32 to vector<8x1xf32>
    %132 = arith.divf %130, %131 : vector<8x1xf32>
    %133 = vector.broadcast %132 : vector<8x1xf32> to vector<8x32xf32>
    %134 = arith.subf %124, %133 : vector<8x32xf32>
    %135 = arith.mulf %134, %134 : vector<8x32xf32>
    %cst_58 = arith.constant dense<0.000000e+00> : vector<8xf32>
    %136 = vector.multi_reduction <add>, %135, %cst_58 [1] : vector<8x32xf32> to vector<8xf32>
    %137 = vector.shape_cast %136 : vector<8xf32> to vector<8x1xf32>
    %cst_59 = arith.constant 3.200000e+01 : f32
    %138 = vector.broadcast %cst_59 : f32 to vector<8x1xf32>
    %139 = arith.divf %137, %138 : vector<8x1xf32>
    %140 = vector.broadcast %132 : vector<8x1xf32> to vector<8x32xf32>
    %141 = arith.subf %124, %140 : vector<8x32xf32>
    %cst_60 = arith.constant 9.99999974E-6 : f32
    %142 = vector.broadcast %cst_60 : f32 to vector<8x1xf32>
    %143 = arith.addf %139, %142 : vector<8x1xf32>
    %144 = math.rsqrt %143 : vector<8x1xf32>
    %145 = vector.broadcast %144 : vector<8x1xf32> to vector<8x32xf32>
    %146 = arith.mulf %141, %145 : vector<8x32xf32>
    %147 = vector.broadcast %126 : vector<1x32xf32> to vector<8x32xf32>
    %148 = arith.mulf %146, %147 : vector<8x32xf32>
    %149 = vector.broadcast %128 : vector<1x32xf32> to vector<8x32xf32>
    %150 = arith.addf %148, %149 : vector<8x32xf32>
    %c0_61 = arith.constant 0 : index
    %c0_62 = arith.constant 0 : index
    %c0_63 = arith.constant 0 : index
    %151 = vector.load %arg16[%c0_61, %c0_62, %c0_63] : memref<1x8x32xf32, #tpu.memory_space<vmem>>, vector<1x8x32xf32>
    %152 = vector.shape_cast %151 : vector<1x8x32xf32> to vector<8x32xf32>
    %153 = vector.shape_cast %150 : vector<8x32xf32> to vector<1x8x32xf32>
    tpu.vector_store %arg16[%c0_61, %c0_62, %c0_63], %153 {strides = array<i32>} : memref<1x8x32xf32, #tpu.memory_space<vmem>>, vector<1x8x32xf32>,
    return
  }
  func.func @transform_0(%arg0: i32, %arg1: i32, %arg2: memref<2xi32, #tpu.memory_space<smem>>) -> (i32, i32, i32) {
    %c0_i32 = arith.constant 0 : i32
    %c0_i32_0 = arith.constant 0 : i32
    %c0_i32_1 = arith.constant 0 : i32
    return %arg0, %c0_i32, %c0_i32_0 : i32, i32, i32
  }
  func.func @transform_1(%arg0: i32, %arg1: i32, %arg2: memref<2xi32, #tpu.memory_space<smem>>) -> (i32, i32, i32) {
    %c0_i32 = arith.constant 0 : i32
    %c0_i32_0 = arith.constant 0 : i32
    %c0_i32_1 = arith.constant 0 : i32
    return %arg1, %c0_i32, %c0_i32_0 : i32, i32, i32
  }
  func.func @transform_2(%arg0: i32, %arg1: i32, %arg2: memref<2xi32, #tpu.memory_space<smem>>) -> (i32, i32, i32) {
    %c0_i32 = arith.constant 0 : i32
    %c0_i32_0 = arith.constant 0 : i32
    %c0_i32_1 = arith.constant 0 : i32
    return %arg1, %c0_i32, %c0_i32_0 : i32, i32, i32
  }
  func.func @transform_3(%arg0: i32, %arg1: i32, %arg2: memref<2xi32, #tpu.memory_space<smem>>) -> (i32, i32, i32, i32) {
    %c0_i32 = arith.constant 0 : i32
    %c0_i32_0 = arith.constant 0 : i32
    %c0_i32_1 = arith.constant 0 : i32
    %c0_i32_2 = arith.constant 0 : i32
    return %arg1, %c0_i32, %c0_i32_0, %c0_i32_1 : i32, i32, i32, i32
  }
  func.func @transform_4(%arg0: i32, %arg1: i32, %arg2: memref<2xi32, #tpu.memory_space<smem>>) -> (i32, i32, i32) {
    %c0_i32 = arith.constant 0 : i32
    %c0_i32_0 = arith.constant 0 : i32
    %c0_i32_1 = arith.constant 0 : i32
    return %arg1, %c0_i32, %c0_i32_0 : i32, i32, i32
  }
  func.func @transform_5(%arg0: i32, %arg1: i32, %arg2: memref<2xi32, #tpu.memory_space<smem>>) -> (i32, i32, i32) {
    %c0_i32 = arith.constant 0 : i32
    %c0_i32_0 = arith.constant 0 : i32
    %c0_i32_1 = arith.constant 0 : i32
    return %arg1, %c0_i32, %c0_i32_0 : i32, i32, i32
  }
  func.func @transform_6(%arg0: i32, %arg1: i32, %arg2: memref<2xi32, #tpu.memory_space<smem>>) -> (i32, i32, i32) {
    %c0_i32 = arith.constant 0 : i32
    %c0_i32_0 = arith.constant 0 : i32
    %c0_i32_1 = arith.constant 0 : i32
    return %arg1, %c0_i32, %c0_i32_0 : i32, i32, i32
  }
  func.func @transform_7(%arg0: i32, %arg1: i32, %arg2: memref<2xi32, #tpu.memory_space<smem>>) -> (i32, i32, i32) {
    %c0_i32 = arith.constant 0 : i32
    %c0_i32_0 = arith.constant 0 : i32
    %c0_i32_1 = arith.constant 0 : i32
    return %arg1, %c0_i32, %c0_i32_0 : i32, i32, i32
  }
  func.func @transform_8(%arg0: i32, %arg1: i32, %arg2: memref<2xi32, #tpu.memory_space<smem>>) -> (i32, i32, i32) {
    %c0_i32 = arith.constant 0 : i32
    %c0_i32_0 = arith.constant 0 : i32
    %c0_i32_1 = arith.constant 0 : i32
    return %arg1, %c0_i32, %c0_i32_0 : i32, i32, i32
  }
  func.func @transform_9(%arg0: i32, %arg1: i32, %arg2: memref<2xi32, #tpu.memory_space<smem>>) -> (i32, i32, i32) {
    %c0_i32 = arith.constant 0 : i32
    %c0_i32_0 = arith.constant 0 : i32
    %c0_i32_1 = arith.constant 0 : i32
    return %arg1, %c0_i32, %c0_i32_0 : i32, i32, i32
  }
  func.func @transform_10(%arg0: i32, %arg1: i32, %arg2: memref<2xi32, #tpu.memory_space<smem>>) -> (i32, i32, i32) {
    %c0_i32 = arith.constant 0 : i32
    %c0_i32_0 = arith.constant 0 : i32
    %c0_i32_1 = arith.constant 0 : i32
    return %arg1, %c0_i32, %c0_i32_0 : i32, i32, i32
  }
  func.func @transform_11(%arg0: i32, %arg1: i32, %arg2: memref<2xi32, #tpu.memory_space<smem>>) -> (i32, i32, i32) {
    %c0_i32 = arith.constant 0 : i32
    %c0_i32_0 = arith.constant 0 : i32
    %c0_i32_1 = arith.constant 0 : i32
    return %arg1, %c0_i32, %c0_i32_0 : i32, i32, i32
  }
  func.func @transform_12(%arg0: i32, %arg1: i32, %arg2: memref<2xi32, #tpu.memory_space<smem>>) -> (i32, i32, i32) {
    %c0_i32 = arith.constant 0 : i32
    %c0_i32_0 = arith.constant 0 : i32
    %c0_i32_1 = arith.constant 0 : i32
    return %arg1, %c0_i32, %c0_i32_0 : i32, i32, i32
  }
  func.func @transform_13(%arg0: i32, %arg1: i32, %arg2: memref<2xi32, #tpu.memory_space<smem>>) -> (i32, i32, i32) {
    %c0_i32 = arith.constant 0 : i32
    %c0_i32_0 = arith.constant 0 : i32
    %c0_i32_1 = arith.constant 0 : i32
    return %arg0, %c0_i32, %c0_i32_0 : i32, i32, i32
  }
}

</mosaic_0001>

<llo_original>
// kernel: tpu_custom_call.1
$region0: #{tpu_custom_call.1}
  #allocation0 [shape = 'u32[]', space=smem, size = 0x4, offset = 0x4, fixed_abs, tag = 'smem constant byte address 0x4 - core index']
  #allocation1 [shape = 'u32[144,128]{1,0:T(1,128)}', space=vmem, size = 0x12000, scoped, tag = 'internal scratch']
  #allocation2 [shape = 's32[1]{0}', space=sflag, size = 0x4, scoped, tag = 'scoped memory for tpu_custom_call.1']
  #allocation3 [shape = 'u8[512]{0}', space=smem, size = 0x200, scoped, tag = 'prefetched SMEM operand 0']
  %s0 = inlined_call_operand.hbm [shape: s32[2], index: 0, kind: input, shape index: {}]
  %s1 = inlined_call_operand.hbm [shape: f32[2,8,32], index: 1, kind: input, shape index: {}]
  %s2 = inlined_call_operand.vmem [shape: bf16[2,32,96], index: 2, kind: input, shape index: {}]
  %s3 = inlined_call_operand.vmem [shape: f32[2,1,96], index: 3, kind: input, shape index: {}]
  %s4 = inlined_call_operand.vmem [shape: bf16[2,4,8,32], index: 4, kind: input, shape index: {}]
  %s5 = inlined_call_operand.vmem [shape: f32[2,1,32], index: 5, kind: input, shape index: {}]
  %s6 = inlined_call_operand.vmem [shape: f32[2,1,32], index: 6, kind: input, shape index: {}]
  %s7 = inlined_call_operand.vmem [shape: f32[2,1,32], index: 7, kind: input, shape index: {}]
  %s8 = inlined_call_operand.vmem [shape: bf16[2,32,64], index: 8, kind: input, shape index: {}]
  %s9 = inlined_call_operand.vmem [shape: f32[2,1,64], index: 9, kind: input, shape index: {}]
  %s10 = inlined_call_operand.vmem [shape: bf16[2,64,32], index: 10, kind: input, shape index: {}]
  %s11 = inlined_call_operand.vmem [shape: f32[2,1,32], index: 11, kind: input, shape index: {}]
  %s12 = inlined_call_operand.vmem [shape: f32[2,1,32], index: 12, kind: input, shape index: {}]
  %s13 = inlined_call_operand.vmem [shape: f32[2,1,32], index: 13, kind: input, shape index: {}]
  %s14 = inlined_call_operand.hbm [shape: f32[2,8,32], index: 14, kind: output, shape index: {}]
  %s15 = sld [smem:[#allocation0]]
  $region93: #{tpu_custom_call.1} parent=0
    _
  %s17 = ssub.s32 1, %s15
  %s18 = scalar_select 0, %s17, %s15
  %20 = dma.hbm_to_smem %s0, 16, [#allocation3], [#allocation2]
  %21 = dma.done [#allocation2], 16
  %22 = sfence
  $region1: #{tpu_custom_call.1} parent=0
    #allocation4 [shape = 'u8[8192]{0}', space=vmem, size = 0x2000, scoped, tag = 'input window, operand 1']
    #allocation5 [shape = 's32[2]{0}', space=sflag, size = 0x8, scoped, tag = 'scoped memory for tpu_custom_call.1']
    #allocation6 [shape = 's32[2]{0}', space=sflag, size = 0x8, scoped, tag = 'scoped memory for tpu_custom_call.1']
    #allocation7 [shape = 'u8[8192]{0}', space=vmem, size = 0x2000, scoped, tag = 'output window, operand 0']
    %23 = vsyncpa [#allocation5], 0
    %s24 = scalar_lea.sflag [#allocation5], 1
    %25 = vsyncpa %s24, 0
    %26 = vsyncpa [#allocation6], 0
    %s27 = scalar_lea.sflag [#allocation6], 1
    %28 = vsyncpa %s27, 0
    loop: start=0, step=1, limit=6
    $region2: #{tpu_custom_call.1} parent=1 // loop_pre_header
      _
    $region3: #{tpu_custom_call.1} parent=1 // loop_header
      %s30 = sphi 0, %s34
      %p31 = scmp.ge.s32.totalorder %s30, 6
      %s37 = sphi 0, %s49
      %s38 = sphi 0, %s45
      %s39 = sphi 0, %s37
      %s40 = sphi 0, %s38
      %s41 = sphi 0, %s39
      %s42 = sphi 0, %s40
      %s52 = sphi 0, %s54
      %s55 = sphi 0, %s52
      %s56 = sphi 0, %s55
      %s72 = sphi 0, %s56
      %s78 = sphi 0, %s80
      %s81 = sphi 0, %s78
      %s82 = sphi 0, %s81
      %s98 = sphi 0, %s82
      %s104 = sphi 0, %s106
      %s107 = sphi 0, %s104
      %s108 = sphi 0, %s107
      %s124 = sphi 0, %s108
      %s130 = sphi 0, %s132
      %s133 = sphi 0, %s130
      %s134 = sphi 0, %s133
      %s150 = sphi 0, %s134
      %s156 = sphi 0, %s158
      %s159 = sphi 0, %s156
      %s160 = sphi 0, %s159
      %s176 = sphi 0, %s160
      %s182 = sphi 0, %s184
      %s185 = sphi 0, %s182
      %s186 = sphi 0, %s185
      %s202 = sphi 0, %s186
      %s208 = sphi 0, %s210
      %s211 = sphi 0, %s208
      %s212 = sphi 0, %s211
      %s228 = sphi 0, %s212
      %s234 = sphi 0, %s236
      %s237 = sphi 0, %s234
      %s238 = sphi 0, %s237
      %s254 = sphi 0, %s238
      %s260 = sphi 0, %s262
      %s263 = sphi 0, %s260
      %s264 = sphi 0, %s263
      %s280 = sphi 0, %s264
      %s286 = sphi 0, %s288
      %s289 = sphi 0, %s286
      %s290 = sphi 0, %s289
      %s306 = sphi 0, %s290
      %s312 = sphi 0, %s314
      %s315 = sphi 0, %s312
      %s316 = sphi 0, %s315
      %s332 = sphi 0, %s316
      %s338 = sphi 0, %s340
      %s341 = sphi 0, %s338
      %s342 = sphi 0, %s341
      %s358 = sphi 0, %s342
      %s364 = sphi 0, %s366
      %s367 = sphi 0, %s364
      %s368 = sphi 0, %s367
      %s384 = sphi 0, %s368
      %s390 = sphi 0, %s392
      %s393 = sphi 0, %s390
      %s394 = sphi 0, %s393
      %s410 = sphi 0, %s394
    $region4: #{tpu_custom_call.1} parent=1 // loop_header_branch
      %33 = sbr.rel (%p31) target = $region8
    $region5: #{tpu_custom_call.1} parent=1 // loop_body
      %s35 = ssub.s32 %s30, 1
      %s36 = ssub.s32 %s30, 2
      %s43 = sadd.s32 1, %s38
      %p44 = scmp.ge.s32.totalorder %s43, 2
      %s45 = scalar_select %p44, 0, %s43
      %s46 = sadd.s32 1, %s37
      %s47 = scalar_select %p44, %s46, %s37
      %p48 = scmp.ge.s32.totalorder %s47, 2
      %s49 = scalar_select %p48, 0, %s47
      %s50 = ssub.s32 %s37, %s49
      %p51 = scmp.eq.s32.totalorder %s50, 0
      %s53 = sadd.s32 %s52, 1
      %s54 = scalar_select %p51, %s52, %s53
      %p57 = pneg %p51
      %p58 = scmp.eq.s32.totalorder %s30, 3
      %p59 = por %p57, %p58
      %p60 = scmp.ne.s32.totalorder %s52, %s55
      %p61 = scmp.eq.s32.totalorder %s30, 0
      %p62 = por %p60, %p61
      %p63 = scmp.ne.s32.totalorder %s52, %s55
      %p64 = scmp.eq.s32.totalorder %s35, 3
      %p65 = por %p63, %p64
      %p66 = scmp.ne.s32.totalorder %s55, %s56
      %p67 = scmp.eq.s32.totalorder %s35, 0
      %p68 = por %p66, %p67
      %p69 = scmp.ne.s32.totalorder %s55, %s56
      %p70 = scmp.eq.s32.totalorder %s36, 3
      %p71 = por %p69, %p70
      %p73 = scmp.ne.s32.totalorder %s56, %s72
      %p74 = scmp.eq.s32.totalorder %s36, 0
      %p75 = por %p73, %p74
      %s76 = ssub.s32 %s38, %s45
      %p77 = scmp.eq.s32.totalorder %s76, 0
      %s79 = sadd.s32 %s78, 1
      %s80 = scalar_select %p77, %s78, %s79
      %p83 = pneg %p77
      %p84 = scmp.eq.s32.totalorder %s30, 3
      %p85 = por %p83, %p84
      %p86 = scmp.ne.s32.totalorder %s78, %s81
      %p87 = scmp.eq.s32.totalorder %s30, 0
      %p88 = por %p86, %p87
      %p89 = scmp.ne.s32.totalorder %s78, %s81
      %p90 = scmp.eq.s32.totalorder %s35, 3
      %p91 = por %p89, %p90
      %p92 = scmp.ne.s32.totalorder %s81, %s82
      %p93 = scmp.eq.s32.totalorder %s35, 0
      %p94 = por %p92, %p93
      %p95 = scmp.ne.s32.totalorder %s81, %s82
      %p96 = scmp.eq.s32.totalorder %s36, 3
      %p97 = por %p95, %p96
      %p99 = scmp.ne.s32.totalorder %s82, %s98
      %p100 = scmp.eq.s32.totalorder %s36, 0
      %p101 = por %p99, %p100
      %s102 = ssub.s32 %s38, %s45
      %p103 = scmp.eq.s32.totalorder %s102, 0
      %s105 = sadd.s32 %s104, 1
      %s106 = scalar_select %p103, %s104, %s105
      %p109 = pneg %p103
      %p110 = scmp.eq.s32.totalorder %s30, 3
      %p111 = por %p109, %p110
      %p112 = scmp.ne.s32.totalorder %s104, %s107
      %p113 = scmp.eq.s32.totalorder %s30, 0
      %p114 = por %p112, %p113
      %p115 = scmp.ne.s32.totalorder %s104, %s107
      %p116 = scmp.eq.s32.totalorder %s35, 3
      %p117 = por %p115, %p116
      %p118 = scmp.ne.s32.totalorder %s107, %s108
      %p119 = scmp.eq.s32.totalorder %s35, 0
      %p120 = por %p118, %p119
      %p121 = scmp.ne.s32.totalorder %s107, %s108
      %p122 = scmp.eq.s32.totalorder %s36, 3
      %p123 = por %p121, %p122
      %p125 = scmp.ne.s32.totalorder %s108, %s124
      %p126 = scmp.eq.s32.totalorder %s36, 0
      %p127 = por %p125, %p126
      %s128 = ssub.s32 %s38, %s45
      %p129 = scmp.eq.s32.totalorder %s128, 0
      %s131 = sadd.s32 %s130, 1
      %s132 = scalar_select %p129, %s130, %s131
      %p135 = pneg %p129
      %p136 = scmp.eq.s32.totalorder %s30, 3
      %p137 = por %p135, %p136
      %p138 = scmp.ne.s32.totalorder %s130, %s133
      %p139 = scmp.eq.s32.totalorder %s30, 0
      %p140 = por %p138, %p139
      %p141 = scmp.ne.s32.totalorder %s130, %s133
      %p142 = scmp.eq.s32.totalorder %s35, 3
      %p143 = por %p141, %p142
      %p144 = scmp.ne.s32.totalorder %s133, %s134
      %p145 = scmp.eq.s32.totalorder %s35, 0
      %p146 = por %p144, %p145
      %p147 = scmp.ne.s32.totalorder %s133, %s134
      %p148 = scmp.eq.s32.totalorder %s36, 3
      %p149 = por %p147, %p148
      %p151 = scmp.ne.s32.totalorder %s134, %s150
      %p152 = scmp.eq.s32.totalorder %s36, 0
      %p153 = por %p151, %p152
      %s154 = ssub.s32 %s38, %s45
      %p155 = scmp.eq.s32.totalorder %s154, 0
      %s157 = sadd.s32 %s156, 1
      %s158 = scalar_select %p155, %s156, %s157
      %p161 = pneg %p155
      %p162 = scmp.eq.s32.totalorder %s30, 3
      %p163 = por %p161, %p162
      %p164 = scmp.ne.s32.totalorder %s156, %s159
      %p165 = scmp.eq.s32.totalorder %s30, 0
      %p166 = por %p164, %p165
      %p167 = scmp.ne.s32.totalorder %s156, %s159
      %p168 = scmp.eq.s32.totalorder %s35, 3
      %p169 = por %p167, %p168
      %p170 = scmp.ne.s32.totalorder %s159, %s160
      %p171 = scmp.eq.s32.totalorder %s35, 0
      %p172 = por %p170, %p171
      %p173 = scmp.ne.s32.totalorder %s159, %s160
      %p174 = scmp.eq.s32.totalorder %s36, 3
      %p175 = por %p173, %p174
      %p177 = scmp.ne.s32.totalorder %s160, %s176
      %p178 = scmp.eq.s32.totalorder %s36, 0
      %p179 = por %p177, %p178
      %s180 = ssub.s32 %s38, %s45
      %p181 = scmp.eq.s32.totalorder %s180, 0
      %s183 = sadd.s32 %s182, 1
      %s184 = scalar_select %p181, %s182, %s183
      %p187 = pneg %p181
      %p188 = scmp.eq.s32.totalorder %s30, 3
      %p189 = por %p187, %p188
      %p190 = scmp.ne.s32.totalorder %s182, %s185
      %p191 = scmp.eq.s32.totalorder %s30, 0
      %p192 = por %p190, %p191
      %p193 = scmp.ne.s32.totalorder %s182, %s185
      %p194 = scmp.eq.s32.totalorder %s35, 3
      %p195 = por %p193, %p194
      %p196 = scmp.ne.s32.totalorder %s185, %s186
      %p197 = scmp.eq.s32.totalorder %s35, 0
      %p198 = por %p196, %p197
      %p199 = scmp.ne.s32.totalorder %s185, %s186
      %p200 = scmp.eq.s32.totalorder %s36, 3
      %p201 = por %p199, %p200
      %p203 = scmp.ne.s32.totalorder %s186, %s202
      %p204 = scmp.eq.s32.totalorder %s36, 0
      %p205 = por %p203, %p204
      %s206 = ssub.s32 %s38, %s45
      %p207 = scmp.eq.s32.totalorder %s206, 0
      %s209 = sadd.s32 %s208, 1
      %s210 = scalar_select %p207, %s208, %s209
      %p213 = pneg %p207
      %p214 = scmp.eq.s32.totalorder %s30, 3
      %p215 = por %p213, %p214
      %p216 = scmp.ne.s32.totalorder %s208, %s211
      %p217 = scmp.eq.s32.totalorder %s30, 0
      %p218 = por %p216, %p217
      %p219 = scmp.ne.s32.totalorder %s208, %s211
      %p220 = scmp.eq.s32.totalorder %s35, 3
      %p221 = por %p219, %p220
      %p222 = scmp.ne.s32.totalorder %s211, %s212
      %p223 = scmp.eq.s32.totalorder %s35, 0
      %p224 = por %p222, %p223
      %p225 = scmp.ne.s32.totalorder %s211, %s212
      %p226 = scmp.eq.s32.totalorder %s36, 3
      %p227 = por %p225, %p226
      %p229 = scmp.ne.s32.totalorder %s212, %s228
      %p230 = scmp.eq.s32.totalorder %s36, 0
      %p231 = por %p229, %p230
      %s232 = ssub.s32 %s38, %s45
      %p233 = scmp.eq.s32.totalorder %s232, 0
      %s235 = sadd.s32 %s234, 1
      %s236 = scalar_select %p233, %s234, %s235
      %p239 = pneg %p233
      %p240 = scmp.eq.s32.totalorder %s30, 3
      %p241 = por %p239, %p240
      %p242 = scmp.ne.s32.totalorder %s234, %s237
      %p243 = scmp.eq.s32.totalorder %s30, 0
      %p244 = por %p242, %p243
      %p245 = scmp.ne.s32.totalorder %s234, %s237
      %p246 = scmp.eq.s32.totalorder %s35, 3
      %p247 = por %p245, %p246
      %p248 = scmp.ne.s32.totalorder %s237, %s238
      %p249 = scmp.eq.s32.totalorder %s35, 0
      %p250 = por %p248, %p249
      %p251 = scmp.ne.s32.totalorder %s237, %s238
      %p252 = scmp.eq.s32.totalorder %s36, 3
      %p253 = por %p251, %p252
      %p255 = scmp.ne.s32.totalorder %s238, %s254
      %p256 = scmp.eq.s32.totalorder %s36, 0
      %p257 = por %p255, %p256
      %s258 = ssub.s32 %s38, %s45
      %p259 = scmp.eq.s32.totalorder %s258, 0
      %s261 = sadd.s32 %s260, 1
      %s262 = scalar_select %p259, %s260, %s261
      %p265 = pneg %p259
      %p266 = scmp.eq.s32.totalorder %s30, 3
      %p267 = por %p265, %p266
      %p268 = scmp.ne.s32.totalorder %s260, %s263
      %p269 = scmp.eq.s32.totalorder %s30, 0
      %p270 = por %p268, %p269
      %p271 = scmp.ne.s32.totalorder %s260, %s263
      %p272 = scmp.eq.s32.totalorder %s35, 3
      %p273 = por %p271, %p272
      %p274 = scmp.ne.s32.totalorder %s263, %s264
      %p275 = scmp.eq.s32.totalorder %s35, 0
      %p276 = por %p274, %p275
      %p277 = scmp.ne.s32.totalorder %s263, %s264
      %p278 = scmp.eq.s32.totalorder %s36, 3
      %p279 = por %p277, %p278
      %p281 = scmp.ne.s32.totalorder %s264, %s280
      %p282 = scmp.eq.s32.totalorder %s36, 0
      %p283 = por %p281, %p282
      %s284 = ssub.s32 %s38, %s45
      %p285 = scmp.eq.s32.totalorder %s284, 0
      %s287 = sadd.s32 %s286, 1
      %s288 = scalar_select %p285, %s286, %s287
      %p291 = pneg %p285
      %p292 = scmp.eq.s32.totalorder %s30, 3
      %p293 = por %p291, %p292
      %p294 = scmp.ne.s32.totalorder %s286, %s289
      %p295 = scmp.eq.s32.totalorder %s30, 0
      %p296 = por %p294, %p295
      %p297 = scmp.ne.s32.totalorder %s286, %s289
      %p298 = scmp.eq.s32.totalorder %s35, 3
      %p299 = por %p297, %p298
      %p300 = scmp.ne.s32.totalorder %s289, %s290
      %p301 = scmp.eq.s32.totalorder %s35, 0
      %p302 = por %p300, %p301
      %p303 = scmp.ne.s32.totalorder %s289, %s290
      %p304 = scmp.eq.s32.totalorder %s36, 3
      %p305 = por %p303, %p304
      %p307 = scmp.ne.s32.totalorder %s290, %s306
      %p308 = scmp.eq.s32.totalorder %s36, 0
      %p309 = por %p307, %p308
      %s310 = ssub.s32 %s38, %s45
      %p311 = scmp.eq.s32.totalorder %s310, 0
      %s313 = sadd.s32 %s312, 1
      %s314 = scalar_select %p311, %s312, %s313
      %p317 = pneg %p311
      %p318 = scmp.eq.s32.totalorder %s30, 3
      %p319 = por %p317, %p318
      %p320 = scmp.ne.s32.totalorder %s312, %s315
      %p321 = scmp.eq.s32.totalorder %s30, 0
      %p322 = por %p320, %p321
      %p323 = scmp.ne.s32.totalorder %s312, %s315
      %p324 = scmp.eq.s32.totalorder %s35, 3
      %p325 = por %p323, %p324
      %p326 = scmp.ne.s32.totalorder %s315, %s316
      %p327 = scmp.eq.s32.totalorder %s35, 0
      %p328 = por %p326, %p327
      %p329 = scmp.ne.s32.totalorder %s315, %s316
      %p330 = scmp.eq.s32.totalorder %s36, 3
      %p331 = por %p329, %p330
      %p333 = scmp.ne.s32.totalorder %s316, %s332
      %p334 = scmp.eq.s32.totalorder %s36, 0
      %p335 = por %p333, %p334
      %s336 = ssub.s32 %s38, %s45
      %p337 = scmp.eq.s32.totalorder %s336, 0
      %s339 = sadd.s32 %s338, 1
      %s340 = scalar_select %p337, %s338, %s339
      %p343 = pneg %p337
      %p344 = scmp.eq.s32.totalorder %s30, 3
      %p345 = por %p343, %p344
      %p346 = scmp.ne.s32.totalorder %s338, %s341
      %p347 = scmp.eq.s32.totalorder %s30, 0
      %p348 = por %p346, %p347
      %p349 = scmp.ne.s32.totalorder %s338, %s341
      %p350 = scmp.eq.s32.totalorder %s35, 3
      %p351 = por %p349, %p350
      %p352 = scmp.ne.s32.totalorder %s341, %s342
      %p353 = scmp.eq.s32.totalorder %s35, 0
      %p354 = por %p352, %p353
      %p355 = scmp.ne.s32.totalorder %s341, %s342
      %p356 = scmp.eq.s32.totalorder %s36, 3
      %p357 = por %p355, %p356
      %p359 = scmp.ne.s32.totalorder %s342, %s358
      %p360 = scmp.eq.s32.totalorder %s36, 0
      %p361 = por %p359, %p360
      %s362 = ssub.s32 %s38, %s45
      %p363 = scmp.eq.s32.totalorder %s362, 0
      %s365 = sadd.s32 %s364, 1
      %s366 = scalar_select %p363, %s364, %s365
      %p369 = pneg %p363
      %p370 = scmp.eq.s32.totalorder %s30, 3
      %p371 = por %p369, %p370
      %p372 = scmp.ne.s32.totalorder %s364, %s367
      %p373 = scmp.eq.s32.totalorder %s30, 0
      %p374 = por %p372, %p373
      %p375 = scmp.ne.s32.totalorder %s364, %s367
      %p376 = scmp.eq.s32.totalorder %s35, 3
      %p377 = por %p375, %p376
      %p378 = scmp.ne.s32.totalorder %s367, %s368
      %p379 = scmp.eq.s32.totalorder %s35, 0
      %p380 = por %p378, %p379
      %p381 = scmp.ne.s32.totalorder %s367, %s368
      %p382 = scmp.eq.s32.totalorder %s36, 3
      %p383 = por %p381, %p382
      %p385 = scmp.ne.s32.totalorder %s368, %s384
      %p386 = scmp.eq.s32.totalorder %s36, 0
      %p387 = por %p385, %p386
      %s388 = ssub.s32 %s37, %s49
      %p389 = scmp.eq.s32.totalorder %s388, 0
      %s391 = sadd.s32 %s390, 1
      %s392 = scalar_select %p389, %s390, %s391
      %p395 = pneg %p389
      %p396 = scmp.eq.s32.totalorder %s30, 3
      %p397 = por %p395, %p396
      %p398 = scmp.ne.s32.totalorder %s390, %s393
      %p399 = scmp.eq.s32.totalorder %s30, 0
      %p400 = por %p398, %p399
      %p401 = scmp.ne.s32.totalorder %s390, %s393
      %p402 = scmp.eq.s32.totalorder %s35, 3
      %p403 = por %p401, %p402
      %p404 = scmp.ne.s32.totalorder %s393, %s394
      %p405 = scmp.eq.s32.totalorder %s35, 0
      %p406 = por %p404, %p405
      %p407 = scmp.ne.s32.totalorder %s393, %s394
      %p408 = scmp.eq.s32.totalorder %s36, 3
      %p409 = por %p407, %p408
      %p411 = scmp.ne.s32.totalorder %s394, %s410
      %p412 = scmp.eq.s32.totalorder %s36, 0
      %p413 = por %p411, %p412
      %p414 = scmp.le.s32.totalorder 1, %s30
      %p415 = scmp.lt.s32.totalorder %s30, 5
      %p416 = pnand %p414, %p415
      %p417 = pneg %p416
      // Predicated region
      $region9: #{tpu_custom_call.1} parent=5 // pred_check
        _
      $region10: #{tpu_custom_call.1} parent=5 // pred_check_branch
        %419 = sbr.rel (%p416) target = $region12
      $region11: #{tpu_custom_call.1} parent=5 // pred_region
        %s420 = ssub.s32 %s30, 1
      $region12: #{tpu_custom_call.1} parent=5 // pred_fallthru
        _
      %p421 = scmp.lt.s32.totalorder %s30, 4
      // Predicated region
      $region13: #{tpu_custom_call.1} parent=5 // pred_check
        %p422 = pneg %p421
      $region14: #{tpu_custom_call.1} parent=5 // pred_check_branch
        %424 = sbr.rel (%p422) target = $region16
      $region15: #{tpu_custom_call.1} parent=5 // pred_region
        // Predicated region
        $region17: #{tpu_custom_call.1} parent=15 // pred_check
          %p425 = pneg %p62
        $region18: #{tpu_custom_call.1} parent=15 // pred_check_branch
          %427 = sbr.rel (%p425) target = $region20
        $region19: #{tpu_custom_call.1} parent=15 // pred_region
          %s428 = sand.u32 %s52, 1
          %s429 = scalar_lea.sflag [#allocation5], %s428
          %s430 = sand.u32 %s52, 1
          %s431 = smul.addr %s430, 8
          %s432 = scalar_lea.vmem [#allocation4], %s431
          %s434 = ssub.s32 128, 128
          %435 = vsyncadd %s429, %s434
          %s436 = smul.addr %s37, 128
          %s437 = scalar_lea.hbm %s1, %s436
          %s439 = sshll.u32 %s432, 4
          %s440 = int_to_ptr.vmem [resolvable:$true] %s439
          %442 = dma.hbm_to_vmem [thread:$0]  %s437, 128, %s440, %s429
        $region20: #{tpu_custom_call.1} parent=15 // pred_fallthru
          _
        // Predicated region
        $region21: #{tpu_custom_call.1} parent=15 // pred_check
          %p443 = pneg %p88
        $region22: #{tpu_custom_call.1} parent=15 // pred_check_branch
          %445 = sbr.rel (%p443) target = $region24
        $region23: #{tpu_custom_call.1} parent=15 // pred_region
          %p446 = scmp.lt.s32.totalorder %s38, 1
          %s447 = scalar_select %p446, %s38, 1
          %s448 = smul.addr %s447, 4
          %s449 = smul.addr %s448, 4
          %s450 = scalar_lea.vmem %s2, %s449
        $region24: #{tpu_custom_call.1} parent=15 // pred_fallthru
          _
        // Predicated region
        $region25: #{tpu_custom_call.1} parent=15 // pred_check
          %p451 = pneg %p114
        $region26: #{tpu_custom_call.1} parent=15 // pred_check_branch
          %453 = sbr.rel (%p451) target = $region28
        $region27: #{tpu_custom_call.1} parent=15 // pred_region
          %p454 = scmp.lt.s32.totalorder %s38, 1
          %s455 = scalar_select %p454, %s38, 1
          %s456 = scalar_lea.vmem %s3, %s455
        $region28: #{tpu_custom_call.1} parent=15 // pred_fallthru
          _
        // Predicated region
        $region29: #{tpu_custom_call.1} parent=15 // pred_check
          %p457 = pneg %p140
        $region30: #{tpu_custom_call.1} parent=15 // pred_check_branch
          %459 = sbr.rel (%p457) target = $region32
        $region31: #{tpu_custom_call.1} parent=15 // pred_region
          %p460 = scmp.lt.s32.totalorder %s38, 1
          %s461 = scalar_select %p460, %s38, 1
          %s462 = smul.addr %s461, 4
          %s463 = smul.addr %s462, 4
          %s464 = scalar_lea.vmem %s4, %s463
        $region32: #{tpu_custom_call.1} parent=15 // pred_fallthru
          _
        // Predicated region
        $region33: #{tpu_custom_call.1} parent=15 // pred_check
          %p465 = pneg %p166
        $region34: #{tpu_custom_call.1} parent=15 // pred_check_branch
          %467 = sbr.rel (%p465) target = $region36
        $region35: #{tpu_custom_call.1} parent=15 // pred_region
          %p468 = scmp.lt.s32.totalorder %s38, 1
          %s469 = scalar_select %p468, %s38, 1
          %s470 = scalar_lea.vmem %s5, %s469
        $region36: #{tpu_custom_call.1} parent=15 // pred_fallthru
          _
        // Predicated region
        $region37: #{tpu_custom_call.1} parent=15 // pred_check
          %p471 = pneg %p192
        $region38: #{tpu_custom_call.1} parent=15 // pred_check_branch
          %473 = sbr.rel (%p471) target = $region40
        $region39: #{tpu_custom_call.1} parent=15 // pred_region
          %p474 = scmp.lt.s32.totalorder %s38, 1
          %s475 = scalar_select %p474, %s38, 1
          %s476 = scalar_lea.vmem %s6, %s475
        $region40: #{tpu_custom_call.1} parent=15 // pred_fallthru
          _
        // Predicated region
        $region41: #{tpu_custom_call.1} parent=15 // pred_check
          %p477 = pneg %p218
        $region42: #{tpu_custom_call.1} parent=15 // pred_check_branch
          %479 = sbr.rel (%p477) target = $region44
        $region43: #{tpu_custom_call.1} parent=15 // pred_region
          %p480 = scmp.lt.s32.totalorder %s38, 1
          %s481 = scalar_select %p480, %s38, 1
          %s482 = scalar_lea.vmem %s7, %s481
        $region44: #{tpu_custom_call.1} parent=15 // pred_fallthru
          _
        // Predicated region
        $region45: #{tpu_custom_call.1} parent=15 // pred_check
          %p483 = pneg %p244
        $region46: #{tpu_custom_call.1} parent=15 // pred_check_branch
          %485 = sbr.rel (%p483) target = $region48
        $region47: #{tpu_custom_call.1} parent=15 // pred_region
          %p486 = scmp.lt.s32.totalorder %s38, 1
          %s487 = scalar_select %p486, %s38, 1
          %s488 = smul.addr %s487, 4
          %s489 = smul.addr %s488, 4
          %s490 = scalar_lea.vmem %s8, %s489
        $region48: #{tpu_custom_call.1} parent=15 // pred_fallthru
          _
        // Predicated region
        $region49: #{tpu_custom_call.1} parent=15 // pred_check
          %p491 = pneg %p270
        $region50: #{tpu_custom_call.1} parent=15 // pred_check_branch
          %493 = sbr.rel (%p491) target = $region52
        $region51: #{tpu_custom_call.1} parent=15 // pred_region
          %p494 = scmp.lt.s32.totalorder %s38, 1
          %s495 = scalar_select %p494, %s38, 1
          %s496 = scalar_lea.vmem %s9, %s495
        $region52: #{tpu_custom_call.1} parent=15 // pred_fallthru
          _
        // Predicated region
        $region53: #{tpu_custom_call.1} parent=15 // pred_check
          %p497 = pneg %p296
        $region54: #{tpu_custom_call.1} parent=15 // pred_check_branch
          %499 = sbr.rel (%p497) target = $region56
        $region55: #{tpu_custom_call.1} parent=15 // pred_region
          %p500 = scmp.lt.s32.totalorder %s38, 1
          %s501 = scalar_select %p500, %s38, 1
          %s502 = smul.addr %s501, 8
          %s503 = smul.addr %s502, 4
          %s504 = scalar_lea.vmem %s10, %s503
        $region56: #{tpu_custom_call.1} parent=15 // pred_fallthru
          _
        // Predicated region
        $region57: #{tpu_custom_call.1} parent=15 // pred_check
          %p505 = pneg %p322
        $region58: #{tpu_custom_call.1} parent=15 // pred_check_branch
          %507 = sbr.rel (%p505) target = $region60
        $region59: #{tpu_custom_call.1} parent=15 // pred_region
          %p508 = scmp.lt.s32.totalorder %s38, 1
          %s509 = scalar_select %p508, %s38, 1
          %s510 = scalar_lea.vmem %s11, %s509
        $region60: #{tpu_custom_call.1} parent=15 // pred_fallthru
          _
        // Predicated region
        $region61: #{tpu_custom_call.1} parent=15 // pred_check
          %p511 = pneg %p348
        $region62: #{tpu_custom_call.1} parent=15 // pred_check_branch
          %513 = sbr.rel (%p511) target = $region64
        $region63: #{tpu_custom_call.1} parent=15 // pred_region
          %p514 = scmp.lt.s32.totalorder %s38, 1
          %s515 = scalar_select %p514, %s38, 1
          %s516 = scalar_lea.vmem %s12, %s515
        $region64: #{tpu_custom_call.1} parent=15 // pred_fallthru
          _
        // Predicated region
        $region65: #{tpu_custom_call.1} parent=15 // pred_check
          %p517 = pneg %p374
        $region66: #{tpu_custom_call.1} parent=15 // pred_check_branch
          %519 = sbr.rel (%p517) target = $region68
        $region67: #{tpu_custom_call.1} parent=15 // pred_region
          %p520 = scmp.lt.s32.totalorder %s38, 1
          %s521 = scalar_select %p520, %s38, 1
          %s522 = scalar_lea.vmem %s13, %s521
        $region68: #{tpu_custom_call.1} parent=15 // pred_fallthru
          _
      $region16: #{tpu_custom_call.1} parent=5 // pred_fallthru
        _
      %p523 = scmp.le.s32.totalorder 1, %s30
      %p524 = scmp.lt.s32.totalorder %s30, 5
      %p525 = pnand %p523, %p524
      %p526 = pneg %p525
      // Predicated region
      $region69: #{tpu_custom_call.1} parent=5 // pred_check
        _
      $region70: #{tpu_custom_call.1} parent=5 // pred_check_branch
        %528 = sbr.rel (%p525) target = $region72
      $region71: #{tpu_custom_call.1} parent=5 // pred_region
        %s529 = ssub.s32 %s30, 1
        %s530 = sand.u32 %s55, 1
        %s531 = scalar_lea.sflag [#allocation5], %s530
        %s532 = sand.u32 %s55, 1
        %s533 = smul.addr %s532, 8
        %s534 = scalar_lea.vmem [#allocation4], %s533
        // Predicated region
        $region73: #{tpu_custom_call.1} parent=71 // pred_check
          %p535 = pneg %p68
        $region74: #{tpu_custom_call.1} parent=71 // pred_check_branch
          %537 = sbr.rel (%p535) target = $region76
        $region75: #{tpu_custom_call.1} parent=71 // pred_region
          %538 = dma.done %s531, 128
        $region76: #{tpu_custom_call.1} parent=71 // pred_fallthru
          _
        %s539 = sand.u32 %s55, 1
        %s540 = scalar_lea.sflag [#allocation5], %s539
        %s541 = sand.u32 %s55, 1
        %s542 = smul.addr %s541, 8
        %s543 = scalar_lea.vmem [#allocation4], %s542
        %p544 = pneg %p68
        %p545 = pneg %p65
        %p546 = scmp.lt.s32.totalorder %s40, 1
        %s547 = scalar_select %p546, %s40, 1
        %s548 = smul.addr %s547, 4
        %s549 = smul.addr %s548, 4
        %s550 = scalar_lea.vmem %s2, %s549
        %p551 = pneg %p94
        %p552 = pneg %p91
        %p553 = scmp.lt.s32.totalorder %s40, 1
        %s554 = scalar_select %p553, %s40, 1
        %s555 = scalar_lea.vmem %s3, %s554
        %p556 = pneg %p120
        %p557 = pneg %p117
        %p558 = scmp.lt.s32.totalorder %s40, 1
        %s559 = scalar_select %p558, %s40, 1
        %s560 = smul.addr %s559, 4
        %s561 = smul.addr %s560, 4
        %s562 = scalar_lea.vmem %s4, %s561
        %p563 = pneg %p146
        %p564 = pneg %p143
        %p565 = scmp.lt.s32.totalorder %s40, 1
        %s566 = scalar_select %p565, %s40, 1
        %s567 = scalar_lea.vmem %s5, %s566
        %p568 = pneg %p172
        %p569 = pneg %p169
        %p570 = scmp.lt.s32.totalorder %s40, 1
        %s571 = scalar_select %p570, %s40, 1
        %s572 = scalar_lea.vmem %s6, %s571
        %p573 = pneg %p198
        %p574 = pneg %p195
        %p575 = scmp.lt.s32.totalorder %s40, 1
        %s576 = scalar_select %p575, %s40, 1
        %s577 = scalar_lea.vmem %s7, %s576
        %p578 = pneg %p224
        %p579 = pneg %p221
        %p580 = scmp.lt.s32.totalorder %s40, 1
        %s581 = scalar_select %p580, %s40, 1
        %s582 = smul.addr %s581, 4
        %s583 = smul.addr %s582, 4
        %s584 = scalar_lea.vmem %s8, %s583
        %p585 = pneg %p250
        %p586 = pneg %p247
        %p587 = scmp.lt.s32.totalorder %s40, 1
        %s588 = scalar_select %p587, %s40, 1
        %s589 = scalar_lea.vmem %s9, %s588
        %p590 = pneg %p276
        %p591 = pneg %p273
        %p592 = scmp.lt.s32.totalorder %s40, 1
        %s593 = scalar_select %p592, %s40, 1
        %s594 = smul.addr %s593, 8
        %s595 = smul.addr %s594, 4
        %s596 = scalar_lea.vmem %s10, %s595
        %p597 = pneg %p302
        %p598 = pneg %p299
        %p599 = scmp.lt.s32.totalorder %s40, 1
        %s600 = scalar_select %p599, %s40, 1
        %s601 = scalar_lea.vmem %s11, %s600
        %p602 = pneg %p328
        %p603 = pneg %p325
        %p604 = scmp.lt.s32.totalorder %s40, 1
        %s605 = scalar_select %p604, %s40, 1
        %s606 = scalar_lea.vmem %s12, %s605
        %p607 = pneg %p354
        %p608 = pneg %p351
        %p609 = scmp.lt.s32.totalorder %s40, 1
        %s610 = scalar_select %p609, %s40, 1
        %s611 = scalar_lea.vmem %s13, %s610
        %p612 = pneg %p380
        %p613 = pneg %p377
        %p614 = pneg %p406
        %p615 = pneg %p403
        %s616 = sand.u32 %s393, 1
        %s617 = scalar_lea.sflag [#allocation6], %s616
        %s618 = sand.u32 %s393, 1
        %s619 = smul.addr %s618, 8
        %s620 = scalar_lea.vmem [#allocation7], %s619
        %p621 = scmp.lt.s32.totalorder %s40, 1
        %s622 = scalar_select %p621, %s40, 1
        %s623 = smul.addr %s622, 4
        %s624 = smul.addr %s623, 4
        %s625 = scalar_lea.vmem %s2, %s624
        %p626 = scmp.lt.s32.totalorder %s40, 1
        %s627 = scalar_select %p626, %s40, 1
        %s628 = scalar_lea.vmem %s3, %s627
        %p629 = scmp.lt.s32.totalorder %s40, 1
        %s630 = scalar_select %p629, %s40, 1
        %s631 = smul.addr %s630, 4
        %s632 = smul.addr %s631, 4
        %s633 = scalar_lea.vmem %s4, %s632
        %p634 = scmp.lt.s32.totalorder %s40, 1
        %s635 = scalar_select %p634, %s40, 1
        %s636 = scalar_lea.vmem %s5, %s635
        %p637 = scmp.lt.s32.totalorder %s40, 1
        %s638 = scalar_select %p637, %s40, 1
        %s639 = scalar_lea.vmem %s6, %s638
        %p640 = scmp.lt.s32.totalorder %s40, 1
        %s641 = scalar_select %p640, %s40, 1
        %s642 = scalar_lea.vmem %s7, %s641
        %p643 = scmp.lt.s32.totalorder %s40, 1
        %s644 = scalar_select %p643, %s40, 1
        %s645 = smul.addr %s644, 4
        %s646 = smul.addr %s645, 4
        %s647 = scalar_lea.vmem %s8, %s646
        %p648 = scmp.lt.s32.totalorder %s40, 1
        %s649 = scalar_select %p648, %s40, 1
        %s650 = scalar_lea.vmem %s9, %s649
        %p651 = scmp.lt.s32.totalorder %s40, 1
        %s652 = scalar_select %p651, %s40, 1
        %s653 = smul.addr %s652, 8
        %s654 = smul.addr %s653, 4
        %s655 = scalar_lea.vmem %s10, %s654
        %p656 = scmp.lt.s32.totalorder %s40, 1
        %s657 = scalar_select %p656, %s40, 1
        %s658 = scalar_lea.vmem %s11, %s657
        %p659 = scmp.lt.s32.totalorder %s40, 1
        %s660 = scalar_select %p659, %s40, 1
        %s661 = scalar_lea.vmem %s12, %s660
        %p662 = scmp.lt.s32.totalorder %s40, 1
        %s663 = scalar_select %p662, %s40, 1
        %s664 = scalar_lea.vmem %s13, %s663
        %p666 = scmp.eq.s32.totalorder %s40, 0
        // Predicated region
        $region77: #{tpu_custom_call.1} parent=71 // pred_check
          %p667 = pneg %p666
        $region78: #{tpu_custom_call.1} parent=71 // pred_check_branch
          %669 = sbr.rel (%p667) target = $region80
        $region79: #{tpu_custom_call.1} parent=71 // pred_region
          %v670 = vld [vmem:[%s534] sm:$0xff]
          %vm671 = vcmask 261120
          %672 = vst.msk [vmem:[%s620] sm:$0xff] %vm671, %v670
        $region80: #{tpu_custom_call.1} parent=71 // pred_fallthru
          _
        %v673 = vld [vmem:[%s620] sm:$0xff]
        %v674 = vpack.c.bf16 %v673, %v673
        %v675 = vld [vmem:[%s625] sm:$0xf]
        %v676 = vld [vmem:[%s625 + $0x4] sm:$0xf]
        %v677 = vld [vmem:[%s625 + $0x8] sm:$0xf]
        %v678 = vld [vmem:[%s625 + $0xc] sm:$0xf]
        %v679 = vld [vmem:[%s628] sm:$0x1]
        %v681 = vlaneseq
        %v682 = vshrl.u32 %v681, 7
        %v683 = vsub.s32 0, %v682
        %v684 = vrot.slane %v679, %v683
        %v690 = vunpack.c.l.b16 %v675
        %v691 = vunpack.c.l.b16 %v676
        %v692 = vunpack.c.l.b16 %v677
        %v693 = vunpack.c.l.b16 %v678
        %v694 = vpack.c.b16 %v691, %v690
        %v695 = vpack.c.b16 %v693, %v692
        %vm698 = vcmask 261120
        %v700 = vsel %vm698, %v674, 0
        %702 = vmatprep.subr.bf16.mxu0 0
        %703 = vmatpush1.bf16.msra.mxu0 0
        %704 = vmatprep.subr.bf16.mxu0 0
        %705 = vmatpush1.bf16.msra.mxu0 0
        %706 = vmatprep.subr.bf16.mxu0 0
        %707 = vmatpush1.bf16.msra.mxu0 0
        %708 = vmatprep.subr.bf16.mxu0 0
        %709 = vmatpush1.bf16.msra.mxu0 0
        %710 = vmatprep.subr.bf16.mxu0 0
        %711 = vmatpush1.bf16.msra.mxu0 0
        %712 = vmatprep.subr.bf16.mxu0 0
        %713 = vmatpush1.bf16.msra.mxu0 0
        %714 = vmatprep.subr.bf16.mxu0 0
        %715 = vmatpush1.bf16.msra.mxu0 %v695
        %716 = vmatprep.subr.bf16.mxu0 0
        %717 = vmatpush1.bf16.msra.mxu0 %v694
        %718 = vmatprep.subr.bf16.mxu0 0
        %719 = vmatpush2.bf16.msra.mxu0 0
        %720 = vmatprep.subr.bf16.mxu0 0
        %721 = vmatpush2.bf16.msra.mxu0 0
        %722 = vmatprep.subr.bf16.mxu0 0
        %723 = vmatpush2.bf16.msra.mxu0 0
        %724 = vmatprep.subr.bf16.mxu0 0
        %725 = vmatpush2.bf16.msra.mxu0 0
        %726 = vmatprep.subr.bf16.mxu0 0
        %727 = vmatpush2.bf16.msra.mxu0 0
        %728 = vmatprep.subr.bf16.mxu0 0
        %729 = vmatpush2.bf16.msra.mxu0 0
        %730 = vmatprep.subr.bf16.mxu0 0
        %731 = vmatpush2.bf16.msra.mxu0 0
        %732 = vmatprep.subr.bf16.mxu0 0
        %733 = vmatpush2.bf16.msra.mxu0 0
        %734 = vmatprep.mubr.bf16.mxu0 0
        %735 = vmatmul.mubr.bf16.gmra.mxu0 %v700
        %v736 = vpop.f32.mrf.mxu0
        %v737 = vadd.f32 %v684, %v736
        %v738 = vpop.f32.mrf.mxu0
        %v739 = vpop.f32.mrf.mxu0
        %v740 = vpop.f32.mrf.mxu0
        %741 = vdwg.mxu0
        %743 = vrot.lane.b32.xlu0 %v737, 120
        %v744 = vpop.permute.xlu0 %743
        %746 = vrot.lane.b32.xlu0 %v737, 112
        %v747 = vpop.permute.xlu0 %746
        %749 = vrot.lane.b32.xlu0 %v737, 104
        %v750 = vpop.permute.xlu0 %749
        %v752 = vpack.c.bf16 %v737, %v737
        %v753 = vpack.c.bf16 %v744, %v744
        %v754 = vpack.c.bf16 %v747, %v747
        %v755 = vpack.c.bf16 %v750, %v750
        %757 = vrot.lane.b32.xlu0 %v752, 96
        %v758 = vpop.permute.xlu0 %757
        %vm759 = vcmask 64512
        %v761 = vsel %vm759, %v752, 0
        %v764 = vsel %vm759, %v758, 0
        %766 = vmatprep.subr.bf16.mxu0 0
        %767 = vmatpush1.bf16.xpose.msra.mxu0 0
        %768 = vmatprep.subr.bf16.mxu0 0
        %769 = vmatpush1.bf16.xpose.msra.mxu0 0
        %770 = vmatprep.subr.bf16.mxu0 0
        %771 = vmatpush1.bf16.xpose.msra.mxu0 0
        %772 = vmatprep.subr.bf16.mxu0 0
        %773 = vmatpush1.bf16.xpose.msra.mxu0 0
        %774 = vmatprep.subr.bf16.mxu0 0
        %775 = vmatpush1.bf16.xpose.msra.mxu0 0
        %776 = vmatprep.subr.bf16.mxu0 0
        %777 = vmatpush1.bf16.xpose.msra.mxu0 0
        %778 = vmatprep.subr.bf16.mxu0 0
        %779 = vmatpush1.bf16.xpose.msra.mxu0 0
        %780 = vmatprep.subr.bf16.mxu0 0
        %781 = vmatpush1.bf16.xpose.msra.mxu0 %v764
        %782 = vmatprep.subr.bf16.mxu0 0
        %783 = vmatpush2.bf16.xpose.msra.mxu0 0
        %784 = vmatprep.subr.bf16.mxu0 0
        %785 = vmatpush2.bf16.xpose.msra.mxu0 0
        %786 = vmatprep.subr.bf16.mxu0 0
        %787 = vmatpush2.bf16.xpose.msra.mxu0 0
        %788 = vmatprep.subr.bf16.mxu0 0
        %789 = vmatpush2.bf16.xpose.msra.mxu0 0
        %790 = vmatprep.subr.bf16.mxu0 0
        %791 = vmatpush2.bf16.xpose.msra.mxu0 0
        %792 = vmatprep.subr.bf16.mxu0 0
        %793 = vmatpush2.bf16.xpose.msra.mxu0 0
        %794 = vmatprep.subr.bf16.mxu0 0
        %795 = vmatpush2.bf16.xpose.msra.mxu0 0
        %796 = vmatprep.subr.bf16.mxu0 0
        %797 = vmatpush2.bf16.xpose.msra.mxu0 0
        %798 = vmatprep.mubr.bf16.mxu0 0
        %799 = vmatmul.mubr.bf16.gmra.mxu0 %v761
        %v800 = vpop.f32.mrf.mxu0
        %v801 = vadd.f32 0.0, %v800
        %v802 = vpop.f32.mrf.mxu0
        %v803 = vpop.f32.mrf.mxu0
        %v804 = vpop.f32.mrf.mxu0
        %805 = vdwg.mxu0
        %807 = vrot.lane.b32.xlu0 %v753, 96
        %v808 = vpop.permute.xlu0 %807
        %v810 = vsel %vm759, %v753, 0
        %v813 = vsel %vm759, %v808, 0
        %815 = vmatprep.subr.bf16.mxu0 0
        %816 = vmatpush1.bf16.xpose.msra.mxu0 0
        %817 = vmatprep.subr.bf16.mxu0 0
        %818 = vmatpush1.bf16.xpose.msra.mxu0 0
        %819 = vmatprep.subr.bf16.mxu0 0
        %820 = vmatpush1.bf16.xpose.msra.mxu0 0
        %821 = vmatprep.subr.bf16.mxu0 0
        %822 = vmatpush1.bf16.xpose.msra.mxu0 0
        %823 = vmatprep.subr.bf16.mxu0 0
        %824 = vmatpush1.bf16.xpose.msra.mxu0 0
        %825 = vmatprep.subr.bf16.mxu0 0
        %826 = vmatpush1.bf16.xpose.msra.mxu0 0
        %827 = vmatprep.subr.bf16.mxu0 0
        %828 = vmatpush1.bf16.xpose.msra.mxu0 0
        %829 = vmatprep.subr.bf16.mxu0 0
        %830 = vmatpush1.bf16.xpose.msra.mxu0 %v813
        %831 = vmatprep.subr.bf16.mxu0 0
        %832 = vmatpush2.bf16.xpose.msra.mxu0 0
        %833 = vmatprep.subr.bf16.mxu0 0
        %834 = vmatpush2.bf16.xpose.msra.mxu0 0
        %835 = vmatprep.subr.bf16.mxu0 0
        %836 = vmatpush2.bf16.xpose.msra.mxu0 0
        %837 = vmatprep.subr.bf16.mxu0 0
        %838 = vmatpush2.bf16.xpose.msra.mxu0 0
        %839 = vmatprep.subr.bf16.mxu0 0
        %840 = vmatpush2.bf16.xpose.msra.mxu0 0
        %841 = vmatprep.subr.bf16.mxu0 0
        %842 = vmatpush2.bf16.xpose.msra.mxu0 0
        %843 = vmatprep.subr.bf16.mxu0 0
        %844 = vmatpush2.bf16.xpose.msra.mxu0 0
        %845 = vmatprep.subr.bf16.mxu0 0
        %846 = vmatpush2.bf16.xpose.msra.mxu0 0
        %847 = vmatprep.mubr.bf16.mxu0 0
        %848 = vmatmul.mubr.bf16.gmra.mxu0 %v810
        %v849 = vpop.f32.mrf.mxu0
        %v850 = vadd.f32 0.0, %v849
        %v851 = vpop.f32.mrf.mxu0
        %v852 = vpop.f32.mrf.mxu0
        %v853 = vpop.f32.mrf.mxu0
        %854 = vdwg.mxu0
        %856 = vrot.lane.b32.xlu0 %v754, 96
        %v857 = vpop.permute.xlu0 %856
        %v859 = vsel %vm759, %v754, 0
        %v862 = vsel %vm759, %v857, 0
        %864 = vmatprep.subr.bf16.mxu0 0
        %865 = vmatpush1.bf16.xpose.msra.mxu0 0
        %866 = vmatprep.subr.bf16.mxu0 0
        %867 = vmatpush1.bf16.xpose.msra.mxu0 0
        %868 = vmatprep.subr.bf16.mxu0 0
        %869 = vmatpush1.bf16.xpose.msra.mxu0 0
        %870 = vmatprep.subr.bf16.mxu0 0
        %871 = vmatpush1.bf16.xpose.msra.mxu0 0
        %872 = vmatprep.subr.bf16.mxu0 0
        %873 = vmatpush1.bf16.xpose.msra.mxu0 0
        %874 = vmatprep.subr.bf16.mxu0 0
        %875 = vmatpush1.bf16.xpose.msra.mxu0 0
        %876 = vmatprep.subr.bf16.mxu0 0
        %877 = vmatpush1.bf16.xpose.msra.mxu0 0
        %878 = vmatprep.subr.bf16.mxu0 0
        %879 = vmatpush1.bf16.xpose.msra.mxu0 %v862
        %880 = vmatprep.subr.bf16.mxu0 0
        %881 = vmatpush2.bf16.xpose.msra.mxu0 0
        %882 = vmatprep.subr.bf16.mxu0 0
        %883 = vmatpush2.bf16.xpose.msra.mxu0 0
        %884 = vmatprep.subr.bf16.mxu0 0
        %885 = vmatpush2.bf16.xpose.msra.mxu0 0
        %886 = vmatprep.subr.bf16.mxu0 0
        %887 = vmatpush2.bf16.xpose.msra.mxu0 0
        %888 = vmatprep.subr.bf16.mxu0 0
        %889 = vmatpush2.bf16.xpose.msra.mxu0 0
        %890 = vmatprep.subr.bf16.mxu0 0
        %891 = vmatpush2.bf16.xpose.msra.mxu0 0
        %892 = vmatprep.subr.bf16.mxu0 0
        %893 = vmatpush2.bf16.xpose.msra.mxu0 0
        %894 = vmatprep.subr.bf16.mxu0 0
        %895 = vmatpush2.bf16.xpose.msra.mxu0 0
        %896 = vmatprep.mubr.bf16.mxu0 0
        %897 = vmatmul.mubr.bf16.gmra.mxu0 %v859
        %v898 = vpop.f32.mrf.mxu0
        %v899 = vadd.f32 0.0, %v898
        %v900 = vpop.f32.mrf.mxu0
        %v901 = vpop.f32.mrf.mxu0
        %v902 = vpop.f32.mrf.mxu0
        %903 = vdwg.mxu0
        %905 = vrot.lane.b32.xlu0 %v755, 96
        %v906 = vpop.permute.xlu0 %905
        %v908 = vsel %vm759, %v755, 0
        %v911 = vsel %vm759, %v906, 0
        %913 = vmatprep.subr.bf16.mxu0 0
        %914 = vmatpush1.bf16.xpose.msra.mxu0 0
        %915 = vmatprep.subr.bf16.mxu0 0
        %916 = vmatpush1.bf16.xpose.msra.mxu0 0
        %917 = vmatprep.subr.bf16.mxu0 0
        %918 = vmatpush1.bf16.xpose.msra.mxu0 0
        %919 = vmatprep.subr.bf16.mxu0 0
        %920 = vmatpush1.bf16.xpose.msra.mxu0 0
        %921 = vmatprep.subr.bf16.mxu0 0
        %922 = vmatpush1.bf16.xpose.msra.mxu0 0
        %923 = vmatprep.subr.bf16.mxu0 0
        %924 = vmatpush1.bf16.xpose.msra.mxu0 0
        %925 = vmatprep.subr.bf16.mxu0 0
        %926 = vmatpush1.bf16.xpose.msra.mxu0 0
        %927 = vmatprep.subr.bf16.mxu0 0
        %928 = vmatpush1.bf16.xpose.msra.mxu0 %v911
        %929 = vmatprep.subr.bf16.mxu0 0
        %930 = vmatpush2.bf16.xpose.msra.mxu0 0
        %931 = vmatprep.subr.bf16.mxu0 0
        %932 = vmatpush2.bf16.xpose.msra.mxu0 0
        %933 = vmatprep.subr.bf16.mxu0 0
        %934 = vmatpush2.bf16.xpose.msra.mxu0 0
        %935 = vmatprep.subr.bf16.mxu0 0
        %936 = vmatpush2.bf16.xpose.msra.mxu0 0
        %937 = vmatprep.subr.bf16.mxu0 0
        %938 = vmatpush2.bf16.xpose.msra.mxu0 0
        %939 = vmatprep.subr.bf16.mxu0 0
        %940 = vmatpush2.bf16.xpose.msra.mxu0 0
        %941 = vmatprep.subr.bf16.mxu0 0
        %942 = vmatpush2.bf16.xpose.msra.mxu0 0
        %943 = vmatprep.subr.bf16.mxu0 0
        %944 = vmatpush2.bf16.xpose.msra.mxu0 0
        %945 = vmatprep.mubr.bf16.mxu0 0
        %946 = vmatmul.mubr.bf16.gmra.mxu0 %v908
        %v947 = vpop.f32.mrf.mxu0
        %v948 = vadd.f32 0.0, %v947
        %v949 = vpop.f32.mrf.mxu0
        %v950 = vpop.f32.mrf.mxu0
        %v951 = vpop.f32.mrf.mxu0
        %952 = vdwg.mxu0
        %v953 = vmul.f32 %v801, 0.35355338
        %v954 = vmul.f32 %v850, 0.35355338
        %v955 = vmul.f32 %v899, 0.35355338
        %v956 = vmul.f32 %v948, 0.35355338
        %v957 = vlaneseq
        %v958 = vand.u32 %v957, 127
        %s959 = sld [smem:[#allocation3 + %s39]]
        %v960 = vstv %s959
        %vm961 = vcmp.lt.s32.totalorder %v958, %v960
        %v962 = vsel %vm961, 1, 0
        %vm963 = vcmp.eq.s32.totalorder %v962, 1
        %v964 = vsel %vm963, %v953, -1000000.0
        %v965 = vsel %vm963, %v954, -1000000.0
        %v966 = vsel %vm963, %v955, -1000000.0
        %v967 = vsel %vm963, %v956, -1000000.0
        %v968 = vsel %vm759, %v964, -inf
        %969 = vmax.xlane.f32.xlu0 %v968
        %v970 = vpop.xlane.xlu0 %969
        %v971 = vsel %vm759, %v965, -inf
        %972 = vmax.xlane.f32.xlu0 %v971
        %v973 = vpop.xlane.xlu0 %972
        %v974 = vsel %vm759, %v966, -inf
        %975 = vmax.xlane.f32.xlu0 %v974
        %v976 = vpop.xlane.xlu0 %975
        %v977 = vsel %vm759, %v967, -inf
        %978 = vmax.xlane.f32.xlu0 %v977
        %v979 = vpop.xlane.xlu0 %978
        %v980 = vsub.f32 %v964, %v970
        %v981 = vsub.f32 %v965, %v973
        %v982 = vsub.f32 %v966, %v976
        %v983 = vsub.f32 %v967, %v979
        %v984 = vmul.f32 %v980, 1.442695
        %v985 = vpow.pop %v984
        %v986 = vmul.f32 %v981, 1.442695
        %v987 = vpow.pop %v986
        %v988 = vmul.f32 %v982, 1.442695
        %v989 = vpow.pop %v988
        %v990 = vmul.f32 %v983, 1.442695
        %v991 = vpow.pop %v990
        %v992 = vsel %vm759, %v985, 0.0
        %993 = vadd.xlane.f32.xlu0 %v992
        %v994 = vpop.xlane.xlu0 %993
        %v995 = vsel %vm759, %v987, 0.0
        %996 = vadd.xlane.f32.xlu0 %v995
        %v997 = vpop.xlane.xlu0 %996
        %v998 = vsel %vm759, %v989, 0.0
        %999 = vadd.xlane.f32.xlu0 %v998
        %v1000 = vpop.xlane.xlu0 %999
        %v1001 = vsel %vm759, %v991, 0.0
        %1002 = vadd.xlane.f32.xlu0 %v1001
        %v1003 = vpop.xlane.xlu0 %1002
        %v1004 = vrcp.pop %v994
        %v1005 = vrcp.pop %v997
        %v1006 = vrcp.pop %v1000
        %v1007 = vrcp.pop %v1003
        %v1008 = vmul.f32 %v985, %v1004
        %v1009 = vmul.f32 %v987, %v1005
        %v1010 = vmul.f32 %v989, %v1006
        %v1011 = vmul.f32 %v991, %v1007
        %v1012 = vpack.c.bf16 %v1008, %v1008
        %v1013 = vpack.c.bf16 %v1009, %v1009
        %v1014 = vpack.c.bf16 %v1010, %v1010
        %v1015 = vpack.c.bf16 %v1011, %v1011
        %1016 = vrot.lane.b32.xlu0 %v752, 64
        %v1017 = vpop.permute.xlu0 %1016
        %v1019 = vsel %vm759, %v1012, 0
        %vm1021 = vcmask 1043456
        %v1023 = vsel %vm1021, %v1017, 0
        %1025 = vmatprep.subr.bf16.mxu0 0
        %1026 = vmatpush1.bf16.msra.mxu0 0
        %1027 = vmatprep.subr.bf16.mxu0 0
        %1028 = vmatpush1.bf16.msra.mxu0 0
        %1029 = vmatprep.subr.bf16.mxu0 0
        %1030 = vmatpush1.bf16.msra.mxu0 0
        %1031 = vmatprep.subr.bf16.mxu0 0
        %1032 = vmatpush1.bf16.msra.mxu0 0
        %1033 = vmatprep.subr.bf16.mxu0 0
        %1034 = vmatpush1.bf16.msra.mxu0 0
        %1035 = vmatprep.subr.bf16.mxu0 0
        %1036 = vmatpush1.bf16.msra.mxu0 0
        %1037 = vmatprep.subr.bf16.mxu0 0
        %1038 = vmatpush1.bf16.msra.mxu0 0
        %1039 = vmatprep.subr.bf16.mxu0 0
        %1040 = vmatpush1.bf16.msra.mxu0 %v1023
        %1041 = vmatprep.subr.bf16.mxu0 0
        %1042 = vmatpush2.bf16.msra.mxu0 0
        %1043 = vmatprep.subr.bf16.mxu0 0
        %1044 = vmatpush2.bf16.msra.mxu0 0
        %1045 = vmatprep.subr.bf16.mxu0 0
        %1046 = vmatpush2.bf16.msra.mxu0 0
        %1047 = vmatprep.subr.bf16.mxu0 0
        %1048 = vmatpush2.bf16.msra.mxu0 0
        %1049 = vmatprep.subr.bf16.mxu0 0
        %1050 = vmatpush2.bf16.msra.mxu0 0
        %1051 = vmatprep.subr.bf16.mxu0 0
        %1052 = vmatpush2.bf16.msra.mxu0 0
        %1053 = vmatprep.subr.bf16.mxu0 0
        %1054 = vmatpush2.bf16.msra.mxu0 0
        %1055 = vmatprep.subr.bf16.mxu0 0
        %1056 = vmatpush2.bf16.msra.mxu0 0
        %1057 = vmatprep.mubr.bf16.mxu0 0
        %1058 = vmatmul.mubr.bf16.gmra.mxu0 %v1019
        %v1059 = vpop.f32.mrf.mxu0
        %v1060 = vadd.f32 0.0, %v1059
        %v1061 = vpop.f32.mrf.mxu0
        %v1062 = vpop.f32.mrf.mxu0
        %v1063 = vpop.f32.mrf.mxu0
        %1064 = vdwg.mxu0
        %1065 = vrot.lane.b32.xlu0 %v753, 64
        %v1066 = vpop.permute.xlu0 %1065
        %v1068 = vsel %vm759, %v1013, 0
        %v1071 = vsel %vm1021, %v1066, 0
        %1073 = vmatprep.subr.bf16.mxu0 0
        %1074 = vmatpush1.bf16.msra.mxu0 0
        %1075 = vmatprep.subr.bf16.mxu0 0
        %1076 = vmatpush1.bf16.msra.mxu0 0
        %1077 = vmatprep.subr.bf16.mxu0 0
        %1078 = vmatpush1.bf16.msra.mxu0 0
        %1079 = vmatprep.subr.bf16.mxu0 0
        %1080 = vmatpush1.bf16.msra.mxu0 0
        %1081 = vmatprep.subr.bf16.mxu0 0
        %1082 = vmatpush1.bf16.msra.mxu0 0
        %1083 = vmatprep.subr.bf16.mxu0 0
        %1084 = vmatpush1.bf16.msra.mxu0 0
        %1085 = vmatprep.subr.bf16.mxu0 0
        %1086 = vmatpush1.bf16.msra.mxu0 0
        %1087 = vmatprep.subr.bf16.mxu0 0
        %1088 = vmatpush1.bf16.msra.mxu0 %v1071
        %1089 = vmatprep.subr.bf16.mxu0 0
        %1090 = vmatpush2.bf16.msra.mxu0 0
        %1091 = vmatprep.subr.bf16.mxu0 0
        %1092 = vmatpush2.bf16.msra.mxu0 0
        %1093 = vmatprep.subr.bf16.mxu0 0
        %1094 = vmatpush2.bf16.msra.mxu0 0
        %1095 = vmatprep.subr.bf16.mxu0 0
        %1096 = vmatpush2.bf16.msra.mxu0 0
        %1097 = vmatprep.subr.bf16.mxu0 0
        %1098 = vmatpush2.bf16.msra.mxu0 0
        %1099 = vmatprep.subr.bf16.mxu0 0
        %1100 = vmatpush2.bf16.msra.mxu0 0
        %1101 = vmatprep.subr.bf16.mxu0 0
        %1102 = vmatpush2.bf16.msra.mxu0 0
        %1103 = vmatprep.subr.bf16.mxu0 0
        %1104 = vmatpush2.bf16.msra.mxu0 0
        %1105 = vmatprep.mubr.bf16.mxu0 0
        %1106 = vmatmul.mubr.bf16.gmra.mxu0 %v1068
        %v1107 = vpop.f32.mrf.mxu0
        %v1108 = vadd.f32 0.0, %v1107
        %v1109 = vpop.f32.mrf.mxu0
        %v1110 = vpop.f32.mrf.mxu0
        %v1111 = vpop.f32.mrf.mxu0
        %1112 = vdwg.mxu0
        %1113 = vrot.lane.b32.xlu0 %v754, 64
        %v1114 = vpop.permute.xlu0 %1113
        %v1116 = vsel %vm759, %v1014, 0
        %v1119 = vsel %vm1021, %v1114, 0
        %1121 = vmatprep.subr.bf16.mxu0 0
        %1122 = vmatpush1.bf16.msra.mxu0 0
        %1123 = vmatprep.subr.bf16.mxu0 0
        %1124 = vmatpush1.bf16.msra.mxu0 0
        %1125 = vmatprep.subr.bf16.mxu0 0
        %1126 = vmatpush1.bf16.msra.mxu0 0
        %1127 = vmatprep.subr.bf16.mxu0 0
        %1128 = vmatpush1.bf16.msra.mxu0 0
        %1129 = vmatprep.subr.bf16.mxu0 0
        %1130 = vmatpush1.bf16.msra.mxu0 0
        %1131 = vmatprep.subr.bf16.mxu0 0
        %1132 = vmatpush1.bf16.msra.mxu0 0
        %1133 = vmatprep.subr.bf16.mxu0 0
        %1134 = vmatpush1.bf16.msra.mxu0 0
        %1135 = vmatprep.subr.bf16.mxu0 0
        %1136 = vmatpush1.bf16.msra.mxu0 %v1119
        %1137 = vmatprep.subr.bf16.mxu0 0
        %1138 = vmatpush2.bf16.msra.mxu0 0
        %1139 = vmatprep.subr.bf16.mxu0 0
        %1140 = vmatpush2.bf16.msra.mxu0 0
        %1141 = vmatprep.subr.bf16.mxu0 0
        %1142 = vmatpush2.bf16.msra.mxu0 0
        %1143 = vmatprep.subr.bf16.mxu0 0
        %1144 = vmatpush2.bf16.msra.mxu0 0
        %1145 = vmatprep.subr.bf16.mxu0 0
        %1146 = vmatpush2.bf16.msra.mxu0 0
        %1147 = vmatprep.subr.bf16.mxu0 0
        %1148 = vmatpush2.bf16.msra.mxu0 0
        %1149 = vmatprep.subr.bf16.mxu0 0
        %1150 = vmatpush2.bf16.msra.mxu0 0
        %1151 = vmatprep.subr.bf16.mxu0 0
        %1152 = vmatpush2.bf16.msra.mxu0 0
        %1153 = vmatprep.mubr.bf16.mxu0 0
        %1154 = vmatmul.mubr.bf16.gmra.mxu0 %v1116
        %v1155 = vpop.f32.mrf.mxu0
        %v1156 = vadd.f32 0.0, %v1155
        %v1157 = vpop.f32.mrf.mxu0
        %v1158 = vpop.f32.mrf.mxu0
        %v1159 = vpop.f32.mrf.mxu0
        %1160 = vdwg.mxu0
        %1161 = vrot.lane.b32.xlu0 %v755, 64
        %v1162 = vpop.permute.xlu0 %1161
        %v1164 = vsel %vm759, %v1015, 0
        %v1167 = vsel %vm1021, %v1162, 0
        %1169 = vmatprep.subr.bf16.mxu0 0
        %1170 = vmatpush1.bf16.msra.mxu0 0
        %1171 = vmatprep.subr.bf16.mxu0 0
        %1172 = vmatpush1.bf16.msra.mxu0 0
        %1173 = vmatprep.subr.bf16.mxu0 0
        %1174 = vmatpush1.bf16.msra.mxu0 0
        %1175 = vmatprep.subr.bf16.mxu0 0
        %1176 = vmatpush1.bf16.msra.mxu0 0
        %1177 = vmatprep.subr.bf16.mxu0 0
        %1178 = vmatpush1.bf16.msra.mxu0 0
        %1179 = vmatprep.subr.bf16.mxu0 0
        %1180 = vmatpush1.bf16.msra.mxu0 0
        %1181 = vmatprep.subr.bf16.mxu0 0
        %1182 = vmatpush1.bf16.msra.mxu0 0
        %1183 = vmatprep.subr.bf16.mxu0 0
        %1184 = vmatpush1.bf16.msra.mxu0 %v1167
        %1185 = vmatprep.subr.bf16.mxu0 0
        %1186 = vmatpush2.bf16.msra.mxu0 0
        %1187 = vmatprep.subr.bf16.mxu0 0
        %1188 = vmatpush2.bf16.msra.mxu0 0
        %1189 = vmatprep.subr.bf16.mxu0 0
        %1190 = vmatpush2.bf16.msra.mxu0 0
        %1191 = vmatprep.subr.bf16.mxu0 0
        %1192 = vmatpush2.bf16.msra.mxu0 0
        %1193 = vmatprep.subr.bf16.mxu0 0
        %1194 = vmatpush2.bf16.msra.mxu0 0
        %1195 = vmatprep.subr.bf16.mxu0 0
        %1196 = vmatpush2.bf16.msra.mxu0 0
        %1197 = vmatprep.subr.bf16.mxu0 0
        %1198 = vmatpush2.bf16.msra.mxu0 0
        %1199 = vmatprep.subr.bf16.mxu0 0
        %1200 = vmatpush2.bf16.msra.mxu0 0
        %1201 = vmatprep.mubr.bf16.mxu0 0
        %1202 = vmatmul.mubr.bf16.gmra.mxu0 %v1164
        %v1203 = vpop.f32.mrf.mxu0
        %v1204 = vadd.f32 0.0, %v1203
        %v1205 = vpop.f32.mrf.mxu0
        %v1206 = vpop.f32.mrf.mxu0
        %v1207 = vpop.f32.mrf.mxu0
        %1208 = vdwg.mxu0
        %v1209 = vpack.c.bf16 %v1060, %v1060
        %v1210 = vpack.c.bf16 %v1108, %v1108
        %v1211 = vpack.c.bf16 %v1156, %v1156
        %v1212 = vpack.c.bf16 %v1204, %v1204
        %v1213 = vld [vmem:[%s633] sm:$0xf]
        %v1214 = vld [vmem:[%s633 + $0x4] sm:$0xf]
        %v1215 = vld [vmem:[%s633 + $0x8] sm:$0xf]
        %v1216 = vld [vmem:[%s633 + $0xc] sm:$0xf]
        %v1218 = vsel %vm759, %v1209, 0
        %v1221 = vsel %vm1021, %v1213, 0
        %1223 = vmatprep.subr.bf16.mxu0 0
        %1224 = vmatpush1.bf16.msra.mxu0 0
        %1225 = vmatprep.subr.bf16.mxu0 0
        %1226 = vmatpush1.bf16.msra.mxu0 0
        %1227 = vmatprep.subr.bf16.mxu0 0
        %1228 = vmatpush1.bf16.msra.mxu0 0
        %1229 = vmatprep.subr.bf16.mxu0 0
        %1230 = vmatpush1.bf16.msra.mxu0 0
        %1231 = vmatprep.subr.bf16.mxu0 0
        %1232 = vmatpush1.bf16.msra.mxu0 0
        %1233 = vmatprep.subr.bf16.mxu0 0
        %1234 = vmatpush1.bf16.msra.mxu0 0
        %1235 = vmatprep.subr.bf16.mxu0 0
        %1236 = vmatpush1.bf16.msra.mxu0 0
        %1237 = vmatprep.subr.bf16.mxu0 0
        %1238 = vmatpush1.bf16.msra.mxu0 %v1221
        %1239 = vmatprep.subr.bf16.mxu0 0
        %1240 = vmatpush2.bf16.msra.mxu0 0
        %1241 = vmatprep.subr.bf16.mxu0 0
        %1242 = vmatpush2.bf16.msra.mxu0 0
        %1243 = vmatprep.subr.bf16.mxu0 0
        %1244 = vmatpush2.bf16.msra.mxu0 0
        %1245 = vmatprep.subr.bf16.mxu0 0
        %1246 = vmatpush2.bf16.msra.mxu0 0
        %1247 = vmatprep.subr.bf16.mxu0 0
        %1248 = vmatpush2.bf16.msra.mxu0 0
        %1249 = vmatprep.subr.bf16.mxu0 0
        %1250 = vmatpush2.bf16.msra.mxu0 0
        %1251 = vmatprep.subr.bf16.mxu0 0
        %1252 = vmatpush2.bf16.msra.mxu0 0
        %1253 = vmatprep.subr.bf16.mxu0 0
        %1254 = vmatpush2.bf16.msra.mxu0 0
        %1255 = vmatprep.mubr.bf16.mxu0 0
        %1256 = vmatmul.mubr.bf16.gmra.mxu0 %v1218
        %v1257 = vpop.f32.mrf.mxu0
        %v1258 = vadd.f32 0.0, %v1257
        %v1259 = vpop.f32.mrf.mxu0
        %v1260 = vpop.f32.mrf.mxu0
        %v1261 = vpop.f32.mrf.mxu0
        %1262 = vdwg.mxu0
        %v1264 = vsel %vm759, %v1210, 0
        %v1267 = vsel %vm1021, %v1214, 0
        %1269 = vmatprep.subr.bf16.mxu0 0
        %1270 = vmatpush1.bf16.msra.mxu0 0
        %1271 = vmatprep.subr.bf16.mxu0 0
        %1272 = vmatpush1.bf16.msra.mxu0 0
        %1273 = vmatprep.subr.bf16.mxu0 0
        %1274 = vmatpush1.bf16.msra.mxu0 0
        %1275 = vmatprep.subr.bf16.mxu0 0
        %1276 = vmatpush1.bf16.msra.mxu0 0
        %1277 = vmatprep.subr.bf16.mxu0 0
        %1278 = vmatpush1.bf16.msra.mxu0 0
        %1279 = vmatprep.subr.bf16.mxu0 0
        %1280 = vmatpush1.bf16.msra.mxu0 0
        %1281 = vmatprep.subr.bf16.mxu0 0
        %1282 = vmatpush1.bf16.msra.mxu0 0
        %1283 = vmatprep.subr.bf16.mxu0 0
        %1284 = vmatpush1.bf16.msra.mxu0 %v1267
        %1285 = vmatprep.subr.bf16.mxu0 0
        %1286 = vmatpush2.bf16.msra.mxu0 0
        %1287 = vmatprep.subr.bf16.mxu0 0
        %1288 = vmatpush2.bf16.msra.mxu0 0
        %1289 = vmatprep.subr.bf16.mxu0 0
        %1290 = vmatpush2.bf16.msra.mxu0 0
        %1291 = vmatprep.subr.bf16.mxu0 0
        %1292 = vmatpush2.bf16.msra.mxu0 0
        %1293 = vmatprep.subr.bf16.mxu0 0
        %1294 = vmatpush2.bf16.msra.mxu0 0
        %1295 = vmatprep.subr.bf16.mxu0 0
        %1296 = vmatpush2.bf16.msra.mxu0 0
        %1297 = vmatprep.subr.bf16.mxu0 0
        %1298 = vmatpush2.bf16.msra.mxu0 0
        %1299 = vmatprep.subr.bf16.mxu0 0
        %1300 = vmatpush2.bf16.msra.mxu0 0
        %1301 = vmatprep.mubr.bf16.mxu0 0
        %1302 = vmatmul.mubr.bf16.gmra.mxu0 %v1264
        %v1303 = vpop.f32.mrf.mxu0
        %v1304 = vadd.f32 0.0, %v1303
        %v1305 = vpop.f32.mrf.mxu0
        %v1306 = vpop.f32.mrf.mxu0
        %v1307 = vpop.f32.mrf.mxu0
        %1308 = vdwg.mxu0
        %v1310 = vsel %vm759, %v1211, 0
        %v1313 = vsel %vm1021, %v1215, 0
        %1315 = vmatprep.subr.bf16.mxu0 0
        %1316 = vmatpush1.bf16.msra.mxu0 0
        %1317 = vmatprep.subr.bf16.mxu0 0
        %1318 = vmatpush1.bf16.msra.mxu0 0
        %1319 = vmatprep.subr.bf16.mxu0 0
        %1320 = vmatpush1.bf16.msra.mxu0 0
        %1321 = vmatprep.subr.bf16.mxu0 0
        %1322 = vmatpush1.bf16.msra.mxu0 0
        %1323 = vmatprep.subr.bf16.mxu0 0
        %1324 = vmatpush1.bf16.msra.mxu0 0
        %1325 = vmatprep.subr.bf16.mxu0 0
        %1326 = vmatpush1.bf16.msra.mxu0 0
        %1327 = vmatprep.subr.bf16.mxu0 0
        %1328 = vmatpush1.bf16.msra.mxu0 0
        %1329 = vmatprep.subr.bf16.mxu0 0
        %1330 = vmatpush1.bf16.msra.mxu0 %v1313
        %1331 = vmatprep.subr.bf16.mxu0 0
        %1332 = vmatpush2.bf16.msra.mxu0 0
        %1333 = vmatprep.subr.bf16.mxu0 0
        %1334 = vmatpush2.bf16.msra.mxu0 0
        %1335 = vmatprep.subr.bf16.mxu0 0
        %1336 = vmatpush2.bf16.msra.mxu0 0
        %1337 = vmatprep.subr.bf16.mxu0 0
        %1338 = vmatpush2.bf16.msra.mxu0 0
        %1339 = vmatprep.subr.bf16.mxu0 0
        %1340 = vmatpush2.bf16.msra.mxu0 0
        %1341 = vmatprep.subr.bf16.mxu0 0
        %1342 = vmatpush2.bf16.msra.mxu0 0
        %1343 = vmatprep.subr.bf16.mxu0 0
        %1344 = vmatpush2.bf16.msra.mxu0 0
        %1345 = vmatprep.subr.bf16.mxu0 0
        %1346 = vmatpush2.bf16.msra.mxu0 0
        %1347 = vmatprep.mubr.bf16.mxu0 0
        %1348 = vmatmul.mubr.bf16.gmra.mxu0 %v1310
        %v1349 = vpop.f32.mrf.mxu0
        %v1350 = vadd.f32 0.0, %v1349
        %v1351 = vpop.f32.mrf.mxu0
        %v1352 = vpop.f32.mrf.mxu0
        %v1353 = vpop.f32.mrf.mxu0
        %1354 = vdwg.mxu0
        %v1356 = vsel %vm759, %v1212, 0
        %v1359 = vsel %vm1021, %v1216, 0
        %1361 = vmatprep.subr.bf16.mxu0 0
        %1362 = vmatpush1.bf16.msra.mxu0 0
        %1363 = vmatprep.subr.bf16.mxu0 0
        %1364 = vmatpush1.bf16.msra.mxu0 0
        %1365 = vmatprep.subr.bf16.mxu0 0
        %1366 = vmatpush1.bf16.msra.mxu0 0
        %1367 = vmatprep.subr.bf16.mxu0 0
        %1368 = vmatpush1.bf16.msra.mxu0 0
        %1369 = vmatprep.subr.bf16.mxu0 0
        %1370 = vmatpush1.bf16.msra.mxu0 0
        %1371 = vmatprep.subr.bf16.mxu0 0
        %1372 = vmatpush1.bf16.msra.mxu0 0
        %1373 = vmatprep.subr.bf16.mxu0 0
        %1374 = vmatpush1.bf16.msra.mxu0 0
        %1375 = vmatprep.subr.bf16.mxu0 0
        %1376 = vmatpush1.bf16.msra.mxu0 %v1359
        %1377 = vmatprep.subr.bf16.mxu0 0
        %1378 = vmatpush2.bf16.msra.mxu0 0
        %1379 = vmatprep.subr.bf16.mxu0 0
        %1380 = vmatpush2.bf16.msra.mxu0 0
        %1381 = vmatprep.subr.bf16.mxu0 0
        %1382 = vmatpush2.bf16.msra.mxu0 0
        %1383 = vmatprep.subr.bf16.mxu0 0
        %1384 = vmatpush2.bf16.msra.mxu0 0
        %1385 = vmatprep.subr.bf16.mxu0 0
        %1386 = vmatpush2.bf16.msra.mxu0 0
        %1387 = vmatprep.subr.bf16.mxu0 0
        %1388 = vmatpush2.bf16.msra.mxu0 0
        %1389 = vmatprep.subr.bf16.mxu0 0
        %1390 = vmatpush2.bf16.msra.mxu0 0
        %1391 = vmatprep.subr.bf16.mxu0 0
        %1392 = vmatpush2.bf16.msra.mxu0 0
        %1393 = vmatprep.mubr.bf16.mxu0 0
        %1394 = vmatmul.mubr.bf16.gmra.mxu0 %v1356
        %v1395 = vpop.f32.mrf.mxu0
        %v1396 = vadd.f32 0.0, %v1395
        %v1397 = vpop.f32.mrf.mxu0
        %v1398 = vpop.f32.mrf.mxu0
        %v1399 = vpop.f32.mrf.mxu0
        %1400 = vdwg.mxu0
        %v1401 = vsel %vm698, %v1258, 0.0
        %v1402 = vsel %vm698, %v1304, 0.0
        %v1403 = vadd.f32 %v1401, %v1402
        %v1404 = vsel %vm698, %v1350, 0.0
        %v1405 = vadd.f32 %v1403, %v1404
        %v1406 = vsel %vm698, %v1396, 0.0
        %v1407 = vadd.f32 %v1405, %v1406
        %v1408 = vld [vmem:[%s636] sm:$0x1]
        %v1410 = vlaneseq
        %v1411 = vshrl.u32 %v1410, 7
        %v1412 = vsub.s32 0, %v1411
        %v1413 = vrot.slane %v1408, %v1412
        %v1415 = vadd.f32 %v1407, %v1413
        %v1416 = vadd.f32 %v1415, %v673
        %v1417 = vld [vmem:[%s639] sm:$0x1]
        %v1418 = vld [vmem:[%s642] sm:$0x1]
        %v1419 = vsel %vm698, %v1416, 0.0
        %1420 = vadd.xlane.f32.xlu0 %v1419
        %v1421 = vpop.xlane.xlu0 %1420
        %v1422 = vrcp.pop 32.0
        %v1423 = vmul.f32 %v1421, %v1422
        %v1424 = vsub.f32 %v1416, %v1423
        %v1425 = vmul.f32 %v1424, %v1424
        %v1426 = vsel %vm698, %v1425, 0.0
        %1427 = vadd.xlane.f32.xlu0 %v1426
        %v1428 = vpop.xlane.xlu0 %1427
        %v1429 = vmul.f32 %v1428, %v1422
        %v1430 = vadd.f32 %v1429, 1e-05
        %v1431 = vrsqrt.pop %v1430
        %v1432 = vmul.f32 %v1424, %v1431
        %v1434 = vlaneseq
        %v1435 = vshrl.u32 %v1434, 7
        %v1436 = vsub.s32 0, %v1435
        %v1437 = vrot.slane %v1417, %v1436
        %v1439 = vmul.f32 %v1432, %v1437
        %v1441 = vlaneseq
        %v1442 = vshrl.u32 %v1441, 7
        %v1443 = vsub.s32 0, %v1442
        %v1444 = vrot.slane %v1418, %v1443
        %v1446 = vadd.f32 %v1439, %v1444
        %v1447 = vpack.c.bf16 %v1446, %v1446
        %v1448 = vld [vmem:[%s647] sm:$0xf]
        %v1449 = vld [vmem:[%s647 + $0x4] sm:$0xf]
        %v1450 = vld [vmem:[%s647 + $0x8] sm:$0xf]
        %v1451 = vld [vmem:[%s647 + $0xc] sm:$0xf]
        %v1452 = vld [vmem:[%s650] sm:$0x1]
        %v1454 = vlaneseq
        %v1455 = vshrl.u32 %v1454, 7
        %v1456 = vsub.s32 0, %v1455
        %v1457 = vrot.slane %v1452, %v1456
        %v1463 = vunpack.c.l.b16 %v1448
        %v1464 = vunpack.c.l.b16 %v1449
        %v1465 = vunpack.c.l.b16 %v1450
        %v1466 = vunpack.c.l.b16 %v1451
        %v1467 = vpack.c.b16 %v1464, %v1463
        %v1468 = vpack.c.b16 %v1466, %v1465
        %v1472 = vsel %vm698, %v1447, 0
        %1474 = vmatprep.subr.bf16.mxu0 0
        %1475 = vmatpush1.bf16.msra.mxu0 0
        %1476 = vmatprep.subr.bf16.mxu0 0
        %1477 = vmatpush1.bf16.msra.mxu0 0
        %1478 = vmatprep.subr.bf16.mxu0 0
        %1479 = vmatpush1.bf16.msra.mxu0 0
        %1480 = vmatprep.subr.bf16.mxu0 0
        %1481 = vmatpush1.bf16.msra.mxu0 0
        %1482 = vmatprep.subr.bf16.mxu0 0
        %1483 = vmatpush1.bf16.msra.mxu0 0
        %1484 = vmatprep.subr.bf16.mxu0 0
        %1485 = vmatpush1.bf16.msra.mxu0 0
        %1486 = vmatprep.subr.bf16.mxu0 0
        %1487 = vmatpush1.bf16.msra.mxu0 %v1468
        %1488 = vmatprep.subr.bf16.mxu0 0
        %1489 = vmatpush1.bf16.msra.mxu0 %v1467
        %1490 = vmatprep.subr.bf16.mxu0 0
        %1491 = vmatpush2.bf16.msra.mxu0 0
        %1492 = vmatprep.subr.bf16.mxu0 0
        %1493 = vmatpush2.bf16.msra.mxu0 0
        %1494 = vmatprep.subr.bf16.mxu0 0
        %1495 = vmatpush2.bf16.msra.mxu0 0
        %1496 = vmatprep.subr.bf16.mxu0 0
        %1497 = vmatpush2.bf16.msra.mxu0 0
        %1498 = vmatprep.subr.bf16.mxu0 0
        %1499 = vmatpush2.bf16.msra.mxu0 0
        %1500 = vmatprep.subr.bf16.mxu0 0
        %1501 = vmatpush2.bf16.msra.mxu0 0
        %1502 = vmatprep.subr.bf16.mxu0 0
        %1503 = vmatpush2.bf16.msra.mxu0 0
        %1504 = vmatprep.subr.bf16.mxu0 0
        %1505 = vmatpush2.bf16.msra.mxu0 0
        %1506 = vmatprep.mubr.bf16.mxu0 0
        %1507 = vmatmul.mubr.bf16.gmra.mxu0 %v1472
        %v1508 = vpop.f32.mrf.mxu0
        %v1509 = vadd.f32 %v1457, %v1508
        %v1510 = vpop.f32.mrf.mxu0
        %v1511 = vpop.f32.mrf.mxu0
        %v1512 = vpop.f32.mrf.mxu0
        %1513 = vdwg.mxu0
        %v1514 = vmax.f32 %v1509, 0.0
        %v1515 = vpack.c.bf16 %v1514, %v1514
        %v1516 = vld [vmem:[%s655] sm:$0xf]
        %v1517 = vld [vmem:[%s655 + $0x4] sm:$0xf]
        %v1518 = vld [vmem:[%s655 + $0x8] sm:$0xf]
        %v1519 = vld [vmem:[%s655 + $0xc] sm:$0xf]
        %v1520 = vld [vmem:[%s655 + $0x10] sm:$0xf]
        %v1521 = vld [vmem:[%s655 + $0x14] sm:$0xf]
        %v1522 = vld [vmem:[%s655 + $0x18] sm:$0xf]
        %v1523 = vld [vmem:[%s655 + $0x1c] sm:$0xf]
        %v1524 = vld [vmem:[%s658] sm:$0x1]
        %v1526 = vlaneseq
        %v1527 = vshrl.u32 %v1526, 7
        %v1528 = vsub.s32 0, %v1527
        %v1529 = vrot.slane %v1524, %v1528
        %v1539 = vunpack.c.l.b16 %v1516
        %v1540 = vunpack.c.l.b16 %v1517
        %v1541 = vunpack.c.l.b16 %v1518
        %v1542 = vunpack.c.l.b16 %v1519
        %v1543 = vunpack.c.l.b16 %v1520
        %v1544 = vunpack.c.l.b16 %v1521
        %v1545 = vunpack.c.l.b16 %v1522
        %v1546 = vunpack.c.l.b16 %v1523
        %v1547 = vpack.c.b16 %v1540, %v1539
        %v1548 = vpack.c.b16 %v1542, %v1541
        %v1549 = vpack.c.b16 %v1544, %v1543
        %v1550 = vpack.c.b16 %v1546, %v1545
        %vm1555 = vcmask 523264
        %v1557 = vsel %vm1555, %v1515, 0
        %1559 = vmatprep.subr.bf16.mxu0 0
        %1560 = vmatpush1.bf16.msra.mxu0 0
        %1561 = vmatprep.subr.bf16.mxu0 0
        %1562 = vmatpush1.bf16.msra.mxu0 0
        %1563 = vmatprep.subr.bf16.mxu0 0
        %1564 = vmatpush1.bf16.msra.mxu0 0
        %1565 = vmatprep.subr.bf16.mxu0 0
        %1566 = vmatpush1.bf16.msra.mxu0 0
        %1567 = vmatprep.subr.bf16.mxu0 0
        %1568 = vmatpush1.bf16.msra.mxu0 %v1550
        %1569 = vmatprep.subr.bf16.mxu0 0
        %1570 = vmatpush1.bf16.msra.mxu0 %v1549
        %1571 = vmatprep.subr.bf16.mxu0 0
        %1572 = vmatpush1.bf16.msra.mxu0 %v1548
        %1573 = vmatprep.subr.bf16.mxu0 0
        %1574 = vmatpush1.bf16.msra.mxu0 %v1547
        %1575 = vmatprep.subr.bf16.mxu0 0
        %1576 = vmatpush2.bf16.msra.mxu0 0
        %1577 = vmatprep.subr.bf16.mxu0 0
        %1578 = vmatpush2.bf16.msra.mxu0 0
        %1579 = vmatprep.subr.bf16.mxu0 0
        %1580 = vmatpush2.bf16.msra.mxu0 0
        %1581 = vmatprep.subr.bf16.mxu0 0
        %1582 = vmatpush2.bf16.msra.mxu0 0
        %1583 = vmatprep.subr.bf16.mxu0 0
        %1584 = vmatpush2.bf16.msra.mxu0 0
        %1585 = vmatprep.subr.bf16.mxu0 0
        %1586 = vmatpush2.bf16.msra.mxu0 0
        %1587 = vmatprep.subr.bf16.mxu0 0
        %1588 = vmatpush2.bf16.msra.mxu0 0
        %1589 = vmatprep.subr.bf16.mxu0 0
        %1590 = vmatpush2.bf16.msra.mxu0 0
        %1591 = vmatprep.mubr.bf16.mxu0 0
        %1592 = vmatmul.mubr.bf16.gmra.mxu0 %v1557
        %v1593 = vpop.f32.mrf.mxu0
        %v1594 = vadd.f32 %v1529, %v1593
        %v1595 = vpop.f32.mrf.mxu0
        %v1596 = vpop.f32.mrf.mxu0
        %v1597 = vpop.f32.mrf.mxu0
        %1598 = vdwg.mxu0
        %v1599 = vadd.f32 %v1594, %v1446
        %v1600 = vld [vmem:[%s661] sm:$0x1]
        %v1601 = vld [vmem:[%s664] sm:$0x1]
        %v1602 = vsel %vm698, %v1599, 0.0
        %1603 = vadd.xlane.f32.xlu0 %v1602
        %v1604 = vpop.xlane.xlu0 %1603
        %v1605 = vmul.f32 %v1604, %v1422
        %v1606 = vsub.f32 %v1599, %v1605
        %v1607 = vmul.f32 %v1606, %v1606
        %v1608 = vsel %vm698, %v1607, 0.0
        %1609 = vadd.xlane.f32.xlu0 %v1608
        %v1610 = vpop.xlane.xlu0 %1609
        %v1611 = vmul.f32 %v1610, %v1422
        %v1612 = vadd.f32 %v1611, 1e-05
        %v1613 = vrsqrt.pop %v1612
        %v1614 = vmul.f32 %v1606, %v1613
        %v1616 = vlaneseq
        %v1617 = vshrl.u32 %v1616, 7
        %v1618 = vsub.s32 0, %v1617
        %v1619 = vrot.slane %v1600, %v1618
        %v1621 = vmul.f32 %v1614, %v1619
        %v1623 = vlaneseq
        %v1624 = vshrl.u32 %v1623, 7
        %v1625 = vsub.s32 0, %v1624
        %v1626 = vrot.slane %v1601, %v1625
        %v1628 = vadd.f32 %v1621, %v1626
        %1629 = vst.msk [vmem:[%s620] sm:$0xff] %vm698, %v1628
        %s1630 = sand.u32 %s393, 1
        %s1631 = scalar_lea.sflag [#allocation6], %s1630
        %s1632 = sand.u32 %s393, 1
        %s1633 = smul.addr %s1632, 8
        %s1634 = scalar_lea.vmem [#allocation7], %s1633
        // Predicated region
        $region81: #{tpu_custom_call.1} parent=71 // pred_check
          %p1635 = pneg %p403
        $region82: #{tpu_custom_call.1} parent=71 // pred_check_branch
          %1637 = sbr.rel (%p1635) target = $region84
        $region83: #{tpu_custom_call.1} parent=71 // pred_region
          %s1639 = ssub.s32 128, 128
          %1640 = vsyncadd %s1631, %s1639
          %s1641 = smul.addr %s39, 128
          %s1642 = scalar_lea.hbm %s14, %s1641
          %s1644 = sshll.u32 %s1634, 4
          %s1645 = int_to_ptr.vmem [resolvable:$true] %s1644
          %1647 = dma.vmem_to_hbm [thread:$0]  %s1645, 128, %s1642, %s1631
        $region84: #{tpu_custom_call.1} parent=71 // pred_fallthru
          _
      $region72: #{tpu_custom_call.1} parent=5 // pred_fallthru
        _
      %p1648 = scmp.le.s32.totalorder 2, %s30
      // Predicated region
      $region85: #{tpu_custom_call.1} parent=5 // pred_check
        %p1649 = pneg %p1648
      $region86: #{tpu_custom_call.1} parent=5 // pred_check_branch
        %1651 = sbr.rel (%p1649) target = $region88
      $region87: #{tpu_custom_call.1} parent=5 // pred_region
        %s1652 = ssub.s32 %s30, 2
        // Predicated region
        $region89: #{tpu_custom_call.1} parent=87 // pred_check
          %p1653 = pneg %p409
        $region90: #{tpu_custom_call.1} parent=87 // pred_check_branch
          %1655 = sbr.rel (%p1653) target = $region92
        $region91: #{tpu_custom_call.1} parent=87 // pred_region
          %s1656 = sand.u32 %s394, 1
          %s1657 = scalar_lea.sflag [#allocation6], %s1656
          %s1658 = sand.u32 %s394, 1
          %s1659 = smul.addr %s1658, 8
          %s1660 = scalar_lea.vmem [#allocation7], %s1659
          %1661 = dma.done %s1657, 128
        $region92: #{tpu_custom_call.1} parent=87 // pred_fallthru
          _
      $region88: #{tpu_custom_call.1} parent=5 // pred_fallthru
        _
    $region6: #{tpu_custom_call.1} parent=1 // loop_footer
      %s34 = sadd.s32 1, %s30
    $region7: #{tpu_custom_call.1} parent=1 // loop_footer_branch
      %29 = sbr.rel target = $region3
    $region8: #{tpu_custom_call.1} parent=1 // loop_exit
      _
    %1662 = vsyncpa [#allocation5], 1
    %s1663 = scalar_lea.sflag [#allocation5], 1
    %1664 = vsyncpa %s1663, 1
    %1665 = vsyncpa [#allocation6], 1
    %s1666 = scalar_lea.sflag [#allocation6], 1
    %1667 = vsyncpa %s1666, 1

</llo_original>
